<compile_context>
chip_gen: v7x
topology: tpu7x:2x2x1
jax: 0.10.0
libtpu: 0.0.40
codegen_flags: <defaults>
</compile_context>

<pallas_src>
import jax
import jax.numpy as jnp
from jax.experimental import pallas as pl
from jax.experimental.pallas import tpu as pltpu

_BN_EPS = 1e-5
_LANE = 128


def _round_up(x, m):
    return ((x + m - 1) // m) * m


def _cdiv(a, b):
    return -(-a // b)


def _vmem_limit_bytes():
    # Per-generation scoped-VMEM budget (v5e/v6e: 128 MiB phys, v7x: 64 MiB).
    try:
        cap = int(pltpu.get_tpu_info().vmem_capacity_bytes)
    except Exception:
        cap = 64 * 1024 * 1024
    return int(min(0.70 * cap, 100 * 1024 * 1024))


# --------------------------------------------------------------------------
# Fused Pallas kernel (closure over static tile sizes)
# --------------------------------------------------------------------------
def _make_fused_kernel(TH, W2, Wp, H2, Cin, Cp, Op, out_c, out_dtype):
    THh = TH + 2              # band + 1 y1-row halo on each side
    K1 = 4 * Cin              # 2x2 space-to-depth contraction width
    R = TH * W2               # output rows produced per grid step
    CK = 3 * Cp               # stage-2 contraction width (3 column taps)
    bf16 = jnp.bfloat16

    def kernel(xt_ref, xm_ref, xb_ref, w1_ref, ep1_ref, w2_ref, ep2_ref,
               w3_ref, ep3_ref, alpha_ref, o_ref, y1_ref):
        a = alpha_ref[0]                       # shared PReLU alpha (SMEM)
        t = pl.program_id(1)                   # row-band index

        # ---- assemble the haloed band: [top halo ; TH rows ; bottom halo] -
        x = jnp.concatenate([xt_ref[0], xm_ref[0], xb_ref[0]], axis=0)
        # x: (THh, Wp, K1) f32

        # ---- stage 1: projection conv (2x2, s2) + bias + PReLU + BN1 ------
        lhs = x.reshape(THh * Wp, K1).astype(bf16)
        y = jnp.dot(lhs, w1_ref[...], preferred_element_type=jnp.float32)
        y = y + ep1_ref[0:1, :]
        y = jnp.where(y >= 0.0, y, a * y)
        y = y * ep1_ref[1:2, :] + ep1_ref[2:3, :]
        y1 = y.reshape(THh, Wp, Cp)

        # Zero everything outside the real H2 x W2 map: this *is* the 3x3
        # conv's zero padding and kills garbage on halo / alignment pixels.
        # 1-D row / column masks broadcast over the lane dim (no 3-D iota).
        grow = t * TH - 1 + jax.lax.broadcasted_iota(jnp.int32, (THh, 1, 1), 0)
        gcol = jax.lax.broadcasted_iota(jnp.int32, (1, Wp, 1), 1)
        valid = (grow >= 0) & (grow < H2) & (gcol >= 1) & (gcol <= W2)
        y1 = jnp.where(valid, y1, 0.0)

        # ---- pack the 3 column taps into the lane dim of the bf16 scratch -
        for dx in range(3):
            y1_ref[:, :, dx * Cp:(dx + 1) * Cp] = (
                y1[:, dx:dx + W2, :].astype(bf16))

        # ---- stage 2: 3x3 conv as 3 matmuls with K = 3*Cp ------------------
        acc = jnp.zeros((R, Cp), jnp.float32)
        for dy in range(3):
            win = y1_ref[dy:dy + TH].reshape(R, CK)
            acc = acc + jnp.dot(win, w2_ref[dy],
                                preferred_element_type=jnp.float32)
        y2 = acc + ep2_ref[0:1, :]
        y2 = jnp.where(y2 >= 0.0, y2, a * y2)
        y2 = y2 * ep2_ref[1:2, :] + ep2_ref[2:3, :]             # (R, Cp)

        # ---- stage 3: 1x1 expansion + bias + PReLU + BN3 -------------------
        z = jnp.dot(y2.astype(bf16), w3_ref[...],
                    preferred_element_type=jnp.float32)          # (R, Op)
        z = z + ep3_ref[0:1, :]
        z = jnp.where(z >= 0.0, z, a * z)
        z = z * ep3_ref[1:2, :] + ep3_ref[2:3, :]
        z = z[:, 0:out_c]                                        # (R, out_c)

        # ---- 2x2 max-pool residual on the first Cin channels ---------------
        # The space-to-depth patches already hold the 2x2 window as 4 channel
        # groups, so the pooled residual is a group-wise max of data already
        # in VMEM (no extra HBM traffic).  Channels >= Cin get zeros, matching
        # torch's zeros-concat.
        xc = xm_ref[0, :, 1:W2 + 1, :].reshape(R, K1)            # f32
        pooled = jnp.maximum(
            jnp.maximum(xc[:, 0:Cin], xc[:, Cin:2 * Cin]),
            jnp.maximum(xc[:, 2 * Cin:3 * Cin], xc[:, 3 * Cin:4 * Cin]))
        if out_c > Cin:
            pooled = jnp.concatenate(
                [pooled, jnp.zeros((R, out_c - Cin), jnp.float32)], axis=1)

        # TODO(synk): Dropout2d is identity in eval mode (dropout_rate unused)
        o_ref[0] = (z + pooled).reshape(TH, W2, out_c).astype(out_dtype)

    return kernel


# --------------------------------------------------------------------------
# Forward pass wrapper
# --------------------------------------------------------------------------
def downsample_block_forward(x_nchw, p):
    N, Cin, H, W = x_nchw.shape
    H2, W2 = H // 2, W // 2
    inter = p["w_proj"].shape[0]
    out_c = p["w_exp"].shape[0]
    K1 = 4 * Cin
    f32, bf16 = jnp.float32, jnp.bfloat16

    Cp = _round_up(inter, _LANE)               # lane-padded matmul widths
    Op = _round_up(out_c, _LANE)
    Wp = _round_up(W2 + 2, 8)                  # 1 left pad + W2 + >=1 right pad

    # ---- single-transpose NCHW -> 2x2 space-to-depth patches (dh, dw, c) ---
    p1 = (x_nchw.astype(f32)
          .reshape(N, Cin, H2, 2, W2, 2)
          .transpose(0, 2, 4, 3, 5, 1)         # (N, H2, W2, dh, dw, Cin)
          .reshape(N, H2, W2, K1))
    p1 = jnp.pad(p1, ((0, 0), (0, 0), (1, Wp - W2 - 1), (0, 0)))

    # ---- band height TH from a per-generation VMEM budget ------------------
    vmem_limit = _vmem_limit_bytes()
    row_bytes = (2 * Wp * K1 * 4               # double-buffered input band
                 + Wp * Cp * 4                 # stage-1 f32 activations
                 + W2 * 3 * Cp * 2             # bf16 column-tap scratch
                 + 2 * W2 * Cp * 4             # stage-2 accumulator + temps
                 + W2 * Op * 4                 # stage-3 activations
                 + 2 * W2 * out_c * 4)         # double-buffered output
    fixed = 4 * (K1 * Cp + 9 * Cp * Cp + Cp * Op) + (2 << 20)
    TH = (int(0.6 * vmem_limit) - fixed) // max(row_bytes, 1)
    TH = int(max(1, min(TH, H2, max(1, 4096 // max(W2, 1)))))
    if N * _cdiv(H2, TH) < 2 and H2 >= 2:      # keep both v7x TCs busy
        TH = _cdiv(H2, 2)
    nT = _cdiv(H2, TH)                         # ragged last band is masked
    THh = TH + 2

    # ---- weights as lane-padded bf16 matmul operands (VMEM resident) -------
    w1 = jnp.pad(jnp.transpose(p["w_proj"], (2, 3, 1, 0)).reshape(K1, inter),
                 ((0, 0), (0, Cp - inter))).astype(bf16)
    w2 = jnp.transpose(p["w_conv2"], (2, 3, 1, 0))             # (kh, kw, I, O)
    w2 = jnp.pad(w2, ((0, 0), (0, 0), (0, Cp - inter), (0, Cp - inter)))
    w2 = w2.reshape(3, 3 * Cp, Cp).astype(bf16)                # K = 3*Cp slabs
    w3 = jnp.transpose(p["w_exp"], (2, 3, 1, 0)).reshape(inter, out_c)
    w3 = jnp.pad(w3, ((0, Cp - inter), (0, Op - out_c))).astype(bf16)

    def epilogue(bias, gamma, beta, mean, var, cpad):
        scale = gamma / jnp.sqrt(var + _BN_EPS)
        shift = beta - mean * scale
        ep = jnp.stack([bias, scale, shift]).astype(f32)       # (3, c)
        return jnp.pad(ep, ((0, 0), (0, cpad - bias.shape[0])))

    ep1 = epilogue(p["b_proj"], p["bn1_gamma"], p["bn1_beta"],
                   p["bn1_mean"], p["bn1_var"], Cp)
    ep2 = epilogue(p["b_conv2"], p["bn2_gamma"], p["bn2_beta"],
                   p["bn2_mean"], p["bn2_var"], Cp)
    ep3 = epilogue(p["b_exp"], p["bn3_gamma"], p["bn3_beta"],
                   p["bn3_mean"], p["bn3_var"], Op)
    alpha = p["alpha"].reshape(1).astype(f32)

    kernel = _make_fused_kernel(TH, W2, Wp, H2, Cin, Cp, Op, out_c, f32)

    const2 = lambda b, t: (0, 0)
    const3 = lambda b, t: (0, 0, 0)

    out = pl.pallas_call(
        kernel,
        out_shape=jax.ShapeDtypeStruct((N, H2, W2, out_c), f32),
        grid_spec=pltpu.PrefetchScalarGridSpec(
            num_scalar_prefetch=0,
            grid=(N, nT),
            in_specs=[
                # Three views of the same array: 1-row top halo, TH-row band,
                # 1-row bottom halo.  Edge halo rows are clamped in-bounds and
                # re-zeroed by the in-kernel validity mask.
                pl.BlockSpec((1, 1, Wp, K1),
                             lambda b, t: (b, jnp.maximum(t * TH - 1, 0), 0, 0)),
                pl.BlockSpec((1, TH, Wp, K1), lambda b, t: (b, t, 0, 0)),
                pl.BlockSpec((1, 1, Wp, K1),
                             lambda b, t: (b, jnp.minimum((t + 1) * TH, H2 - 1),
                                           0, 0)),
                # Constant-index weights / epilogues stay resident in VMEM.
                # TODO(synk): pipeline_mode=pl.Buffered(1) would single-buffer
                # these once that knob is reliable through pallas_call on TPU.
                pl.BlockSpec((K1, Cp), const2),
                pl.BlockSpec((3, Cp), const2),
                pl.BlockSpec((3, 3 * Cp, Cp), const3),
                pl.BlockSpec((3, Cp), const2),
                pl.BlockSpec((Cp, Op), const2),
                pl.BlockSpec((3, Op), const2),
                pl.BlockSpec(memory_space=pltpu.MemorySpace.SMEM),   # alpha
            ],
            out_specs=pl.BlockSpec((1, TH, W2, out_c),
                                   lambda b, t: (b, t, 0, 0)),
            scratch_shapes=[pltpu.VMEM((THh, W2, 3 * Cp), bf16)],
        ),
        compiler_params=pltpu.CompilerParams(
            dimension_semantics=("parallel", "parallel"),
            vmem_limit_bytes=vmem_limit,
        ),
    )(p1, p1, p1, w1, ep1, w2, ep2, w3, ep3, alpha)

    return jnp.transpose(out, (0, 3, 1, 2))     # back to NCHW (module layout)


# --------------------------------------------------------------------------
# Deterministic parameter init (shapes from the module's __init__)
# --------------------------------------------------------------------------
def init_params(key, in_c, out_c, ratio):
    inter = in_c // ratio
    ks = jax.random.split(key, 18)
    nrm = lambda k, s: 0.1 * jax.random.normal(k, s, jnp.float32)
    return {
        "w_proj": nrm(ks[0], (inter, in_c, 2, 2)),
        "b_proj": nrm(ks[1], (inter,)),
        "w_conv2": nrm(ks[2], (inter, inter, 3, 3)),
        "b_conv2": nrm(ks[3], (inter,)),
        "w_exp": nrm(ks[4], (out_c, inter, 1, 1)),
        "b_exp": nrm(ks[5], (out_c,)),
        "alpha": jnp.array(0.25, jnp.float32),          # nn.PReLU() default
        "bn1_gamma": 1.0 + nrm(ks[6], (inter,)),
        "bn1_beta": nrm(ks[7], (inter,)),
        "bn1_mean": nrm(ks[8], (inter,)),
        "bn1_var": 1.0 + 0.1 * jax.random.uniform(ks[9], (inter,)),
        "bn2_gamma": 1.0 + nrm(ks[10], (inter,)),
        "bn2_beta": nrm(ks[11], (inter,)),
        "bn2_mean": nrm(ks[12], (inter,)),
        "bn2_var": 1.0 + 0.1 * jax.random.uniform(ks[13], (inter,)),
        "bn3_gamma": 1.0 + nrm(ks[14], (out_c,)),
        "bn3_beta": nrm(ks[15], (out_c,)),
        "bn3_mean": nrm(ks[16], (out_c,)),
        "bn3_var": 1.0 + 0.1 * jax.random.uniform(ks[17], (out_c,)),
    }


# --------------------------------------------------------------------------
# Pure-JAX reference (correctness check only)
# --------------------------------------------------------------------------
def ref_forward(x, p):
    def conv(x, w, b, stride, padding):
        y = jax.lax.conv_general_dilated(
            x, w, (stride, stride), padding,
            dimension_numbers=("NCHW", "OIHW", "NCHW"))
        return y + b.reshape(1, -1, 1, 1)

    def prelu(y):
        return jnp.where(y >= 0, y, p["alpha"] * y)

    def bn(y, g, bta, m, v):
        r = lambda a: a.reshape(1, -1, 1, 1)
        return (y - r(m)) / jnp.sqrt(r(v) + _BN_EPS) * r(g) + r(bta)

    N, C, H, W = x.shape
    identity = x.reshape(N, C, H // 2, 2, W // 2, 2).max(axis=(3, 5))
    y = bn(prelu(conv(x, p["w_proj"], p["b_proj"], 2, "VALID")),
           p["bn1_gamma"], p["bn1_beta"], p["bn1_mean"], p["bn1_var"])
    y = bn(prelu(conv(y, p["w_conv2"], p["b_conv2"], 1, ((1, 1), (1, 1)))),
           p["bn2_gamma"], p["bn2_beta"], p["bn2_mean"], p["bn2_var"])
    y = bn(prelu(conv(y, p["w_exp"], p["b_exp"], 1, "VALID")),
           p["bn3_gamma"], p["bn3_beta"], p["bn3_mean"], p["bn3_var"])
    out_c = y.shape[1]
    pad = jnp.zeros((N, out_c - C, H // 2, W // 2), y.dtype)
    identity = jnp.concatenate([identity, pad], axis=1)
    return y + identity


# --------------------------------------------------------------------------
if __name__ == "__main__":
    N, Cin, H, W = 2, 4, 16, 16
    out_channels, ratio, dropout_rate = 8, 2, 0.1

    key = jax.random.PRNGKey(0)
    kx, kp = jax.random.split(key)
    x = jax.random.normal(kx, (N, Cin, H, W), jnp.float32)
    params = init_params(kp, Cin, out_channels, ratio)

    fwd = jax.jit(downsample_block_forward)
    out = jax.block_until_ready(fwd(x, params))

    ref = ref_forward(x, params)
    assert out.shape == (N, out_channels, H // 2, W // 2), out.shape
    max_err = float(jnp.max(jnp.abs(out - ref)))
    # bf16 MXU operands with f32 accumulation -> loosened tolerance vs f32 ref
    assert jnp.allclose(out, ref, atol=5e-2, rtol=5e-2), max_err

    print("KERNEL_OK")
</pallas_src>

<mosaic_0001>
module attributes {stable_mosaic.version = 11 : i64} {
  func.func @kernel(%arg0: i32, %arg1: i32, %arg2: memref<1x1x16x16xf32, #tpu.memory_space<vmem>>, %arg3: memref<1x8x16x16xf32, #tpu.memory_space<vmem>>, %arg4: memref<1x1x16x16xf32, #tpu.memory_space<vmem>>, %arg5: memref<16x128xbf16, #tpu.memory_space<vmem>>, %arg6: memref<3x128xf32, #tpu.memory_space<vmem>>, %arg7: memref<3x384x128xbf16, #tpu.memory_space<vmem>>, %arg8: memref<3x128xf32, #tpu.memory_space<vmem>>, %arg9: memref<128x128xbf16, #tpu.memory_space<vmem>>, %arg10: memref<3x128xf32, #tpu.memory_space<vmem>>, %arg11: memref<1xf32, #tpu.memory_space<smem>>, %arg12: memref<1x8x8x8xf32, #tpu.memory_space<vmem>>, %arg13: memref<10x8x384xbf16, #tpu.memory_space<vmem>>) attributes {dimension_semantics = [#tpu.dimension_semantics<parallel>, #tpu.dimension_semantics<parallel>], iteration_bounds = array<i64: 2, 1>, scalar_prefetch = 0 : i64, scratch_operands = 1 : i64, tpu.core_type = #tpu.core_type<tc>, window_params = [{transform_indices = @transform_0, window_bounds = array<i64: 1, 1, 16, 16>}, {transform_indices = @transform_1, window_bounds = array<i64: 1, 8, 16, 16>}, {transform_indices = @transform_2, window_bounds = array<i64: 1, 1, 16, 16>}, {pipeline_mode = #tpu.pipeline_mode<synchronous>, transform_indices = @transform_3, window_bounds = array<i64: 16, 128>}, {pipeline_mode = #tpu.pipeline_mode<synchronous>, transform_indices = @transform_4, window_bounds = array<i64: 3, 128>}, {pipeline_mode = #tpu.pipeline_mode<synchronous>, transform_indices = @transform_5, window_bounds = array<i64: 3, 384, 128>}, {pipeline_mode = #tpu.pipeline_mode<synchronous>, transform_indices = @transform_6, window_bounds = array<i64: 3, 128>}, {pipeline_mode = #tpu.pipeline_mode<synchronous>, transform_indices = @transform_7, window_bounds = array<i64: 128, 128>}, {pipeline_mode = #tpu.pipeline_mode<synchronous>, transform_indices = @transform_8, window_bounds = array<i64: 3, 128>}, {transform_indices = @transform_9, window_bounds = array<i64: 1>}, {transform_indices = @transform_10, window_bounds = array<i64: 1, 8, 8, 8>}]} {
    %c0 = arith.constant 0 : index
    %0 = memref.load %arg11[%c0] : memref<1xf32, #tpu.memory_space<smem>>
    %c0_0 = arith.constant 0 : index
    %c0_1 = arith.constant 0 : index
    %c0_2 = arith.constant 0 : index
    %c0_3 = arith.constant 0 : index
    %1 = vector.load %arg2[%c0_0, %c0_1, %c0_2, %c0_3] : memref<1x1x16x16xf32, #tpu.memory_space<vmem>>, vector<1x1x16x16xf32>
    %2 = vector.shape_cast %1 : vector<1x1x16x16xf32> to vector<1x16x16xf32>
    %c0_4 = arith.constant 0 : index
    %c0_5 = arith.constant 0 : index
    %c0_6 = arith.constant 0 : index
    %c0_7 = arith.constant 0 : index
    %3 = vector.load %arg3[%c0_4, %c0_5, %c0_6, %c0_7] : memref<1x8x16x16xf32, #tpu.memory_space<vmem>>, vector<1x8x16x16xf32>
    %4 = vector.shape_cast %3 : vector<1x8x16x16xf32> to vector<8x16x16xf32>
    %c0_8 = arith.constant 0 : index
    %c0_9 = arith.constant 0 : index
    %c0_10 = arith.constant 0 : index
    %c0_11 = arith.constant 0 : index
    %5 = vector.load %arg4[%c0_8, %c0_9, %c0_10, %c0_11] : memref<1x1x16x16xf32, #tpu.memory_space<vmem>>, vector<1x1x16x16xf32>
    %6 = vector.shape_cast %5 : vector<1x1x16x16xf32> to vector<1x16x16xf32>
    %7 = tpu.concatenate %2, %4, %6 in 0 : vector<1x16x16xf32>, vector<8x16x16xf32>, vector<1x16x16xf32> -> vector<10x16x16xf32>
    %8 = vector.shape_cast %7 : vector<10x16x16xf32> to vector<160x16xf32>
    %9 = arith.truncf %8 : vector<160x16xf32> to vector<160x16xbf16>
    %c0_12 = arith.constant 0 : index
    %c0_13 = arith.constant 0 : index
    %10 = vector.load %arg5[%c0_12, %c0_13] : memref<16x128xbf16, #tpu.memory_space<vmem>>, vector<16x128xbf16>
    %cst = arith.constant dense<0.000000e+00> : vector<160x128xf32>
    %11 = tpu.matmul %9, %10, %cst {dimension_numbers = #tpu.dot_dimension_numbers<[1], [0], [0], [1], [0, 0, 1, 1], [], []>} : vector<160x16xbf16>, vector<16x128xbf16>, vector<160x128xf32> -> vector<160x128xf32>
    %c0_14 = arith.constant 0 : index
    %c0_15 = arith.constant 0 : index
    %12 = vector.load %arg6[%c0_14, %c0_15] : memref<3x128xf32, #tpu.memory_space<vmem>>, vector<1x128xf32>
    %13 = vector.broadcast %12 : vector<1x128xf32> to vector<160x128xf32>
    %14 = arith.addf %11, %13 : vector<160x128xf32>
    %cst_16 = arith.constant 0.000000e+00 : f32
    %15 = vector.broadcast %cst_16 : f32 to vector<160x128xf32>
    %16 = arith.cmpf oge, %14, %15 : vector<160x128xf32>
    %17 = vector.broadcast %0 : f32 to vector<160x128xf32>
    %18 = arith.mulf %17, %14 : vector<160x128xf32>
    %19 = arith.select %16, %14, %18 : vector<160x128xi1>, vector<160x128xf32>
    %c1 = arith.constant 1 : index
    %c0_17 = arith.constant 0 : index
    %20 = vector.load %arg6[%c1, %c0_17] : memref<3x128xf32, #tpu.memory_space<vmem>>, vector<1x128xf32>
    %21 = vector.broadcast %20 : vector<1x128xf32> to vector<160x128xf32>
    %22 = arith.mulf %19, %21 : vector<160x128xf32>
    %c2 = arith.constant 2 : index
    %c0_18 = arith.constant 0 : index
    %23 = vector.load %arg6[%c2, %c0_18] : memref<3x128xf32, #tpu.memory_space<vmem>>, vector<1x128xf32>
    %24 = vector.broadcast %23 : vector<1x128xf32> to vector<160x128xf32>
    %25 = arith.addf %22, %24 : vector<160x128xf32>
    %26 = vector.shape_cast %25 : vector<160x128xf32> to vector<10x16x128xf32>
    %c8_i32 = arith.constant 8 : i32
    %27 = arith.muli %arg1, %c8_i32 : i32
    %c1_i32 = arith.constant 1 : i32
    %28 = arith.subi %27, %c1_i32 : i32
    %29 = tpu.iota {dimensions = array<i32: 0>} : vector<10x1x1xi32>
    %30 = vector.broadcast %28 : i32 to vector<10x1x1xi32>
    %31 = arith.addi %30, %29 : vector<10x1x1xi32>
    %32 = tpu.iota {dimensions = array<i32: 1>} : vector<1x16x1xi32>
    %c0_i32 = arith.constant 0 : i32
    %33 = vector.broadcast %c0_i32 : i32 to vector<10x1x1xi32>
    %34 = arith.cmpi sge, %31, %33 : vector<10x1x1xi32>
    %c8_i32_19 = arith.constant 8 : i32
    %35 = vector.broadcast %c8_i32_19 : i32 to vector<10x1x1xi32>
    %36 = arith.cmpi slt, %31, %35 : vector<10x1x1xi32>
    %37 = arith.andi %34, %36 : vector<10x1x1xi1>
    %c1_i32_20 = arith.constant 1 : i32
    %38 = vector.broadcast %c1_i32_20 : i32 to vector<1x16x1xi32>
    %39 = arith.cmpi sge, %32, %38 : vector<1x16x1xi32>
    %40 = vector.broadcast %37 : vector<10x1x1xi1> to vector<10x16x1xi1>
    %41 = vector.broadcast %39 : vector<1x16x1xi1> to vector<10x16x1xi1>
    %42 = arith.andi %40, %41 : vector<10x16x1xi1>
    %c8_i32_21 = arith.constant 8 : i32
    %43 = vector.broadcast %c8_i32_21 : i32 to vector<1x16x1xi32>
    %44 = arith.cmpi sle, %32, %43 : vector<1x16x1xi32>
    %45 = vector.broadcast %44 : vector<1x16x1xi1> to vector<10x16x1xi1>
    %46 = arith.andi %42, %45 : vector<10x16x1xi1>
    %cst_22 = arith.constant 0.000000e+00 : f32
    %47 = vector.shape_cast %46 : vector<10x16x1xi1> to vector<10x16x1xi1>
    %48 = vector.broadcast %47 : vector<10x16x1xi1> to vector<10x16x128xi1>
    %49 = vector.broadcast %cst_22 : f32 to vector<10x16x128xf32>
    %50 = arith.select %48, %26, %49 : vector<10x16x128xi1>, vector<10x16x128xf32>
    %51 = vector.extract_strided_slice %50 {offsets = [0, 0, 0], sizes = [10, 8, 128], strides = [1, 1, 1]} : vector<10x16x128xf32> to vector<10x8x128xf32>
    %52 = arith.truncf %51 : vector<10x8x128xf32> to vector<10x8x128xbf16>
    %c0_23 = arith.constant 0 : index
    %c0_24 = arith.constant 0 : index
    %c0_25 = arith.constant 0 : index
    %53 = vector.load %arg13[%c0_23, %c0_24, %c0_25] : memref<10x8x384xbf16, #tpu.memory_space<vmem>>, vector<10x8x128xbf16>
    tpu.vector_store %arg13[%c0_23, %c0_24, %c0_25], %52 {strides = array<i32>} : memref<10x8x384xbf16, #tpu.memory_space<vmem>>, vector<10x8x128xbf16>,
    %54 = vector.extract_strided_slice %50 {offsets = [0, 1, 0], sizes = [10, 8, 128], strides = [1, 1, 1]} : vector<10x16x128xf32> to vector<10x8x128xf32>
    %55 = arith.truncf %54 : vector<10x8x128xf32> to vector<10x8x128xbf16>
    %c0_26 = arith.constant 0 : index
    %c0_27 = arith.constant 0 : index
    %c128 = arith.constant 128 : index
    %56 = vector.load %arg13[%c0_26, %c0_27, %c128] : memref<10x8x384xbf16, #tpu.memory_space<vmem>>, vector<10x8x128xbf16>
    tpu.vector_store %arg13[%c0_26, %c0_27, %c128], %55 {strides = array<i32>} : memref<10x8x384xbf16, #tpu.memory_space<vmem>>, vector<10x8x128xbf16>,
    %57 = vector.extract_strided_slice %50 {offsets = [0, 2, 0], sizes = [10, 8, 128], strides = [1, 1, 1]} : vector<10x16x128xf32> to vector<10x8x128xf32>
    %58 = arith.truncf %57 : vector<10x8x128xf32> to vector<10x8x128xbf16>
    %c0_28 = arith.constant 0 : index
    %c0_29 = arith.constant 0 : index
    %c256 = arith.constant 256 : index
    %59 = vector.load %arg13[%c0_28, %c0_29, %c256] : memref<10x8x384xbf16, #tpu.memory_space<vmem>>, vector<10x8x128xbf16>
    tpu.vector_store %arg13[%c0_28, %c0_29, %c256], %58 {strides = array<i32>} : memref<10x8x384xbf16, #tpu.memory_space<vmem>>, vector<10x8x128xbf16>,
    %cst_30 = arith.constant 0.000000e+00 : f32
    %60 = vector.broadcast %cst_30 : f32 to vector<64x128xf32>
    %c0_31 = arith.constant 0 : index
    %c0_32 = arith.constant 0 : index
    %c0_33 = arith.constant 0 : index
    %61 = vector.load %arg13[%c0_31, %c0_32, %c0_33] : memref<10x8x384xbf16, #tpu.memory_space<vmem>>, vector<8x8x384xbf16>
    %62 = vector.shape_cast %61 : vector<8x8x384xbf16> to vector<64x384xbf16>
    %c0_34 = arith.constant 0 : index
    %c0_35 = arith.constant 0 : index
    %c0_36 = arith.constant 0 : index
    %63 = vector.load %arg7[%c0_34, %c0_35, %c0_36] : memref<3x384x128xbf16, #tpu.memory_space<vmem>>, vector<1x384x128xbf16>
    %64 = vector.shape_cast %63 : vector<1x384x128xbf16> to vector<384x128xbf16>
    %cst_37 = arith.constant dense<0.000000e+00> : vector<64x128xf32>
    %65 = tpu.matmul %62, %64, %cst_37 {dimension_numbers = #tpu.dot_dimension_numbers<[1], [0], [0], [1], [0, 0, 1, 1], [], []>} : vector<64x384xbf16>, vector<384x128xbf16>, vector<64x128xf32> -> vector<64x128xf32>
    %66 = arith.addf %60, %65 : vector<64x128xf32>
    %c1_38 = arith.constant 1 : index
    %c0_39 = arith.constant 0 : index
    %c0_40 = arith.constant 0 : index
    %67 = vector.load %arg13[%c1_38, %c0_39, %c0_40] : memref<10x8x384xbf16, #tpu.memory_space<vmem>>, vector<8x8x384xbf16>
    %68 = vector.shape_cast %67 : vector<8x8x384xbf16> to vector<64x384xbf16>
    %c1_41 = arith.constant 1 : index
    %c0_42 = arith.constant 0 : index
    %c0_43 = arith.constant 0 : index
    %69 = vector.load %arg7[%c1_41, %c0_42, %c0_43] : memref<3x384x128xbf16, #tpu.memory_space<vmem>>, vector<1x384x128xbf16>
    %70 = vector.shape_cast %69 : vector<1x384x128xbf16> to vector<384x128xbf16>
    %cst_44 = arith.constant dense<0.000000e+00> : vector<64x128xf32>
    %71 = tpu.matmul %68, %70, %cst_44 {dimension_numbers = #tpu.dot_dimension_numbers<[1], [0], [0], [1], [0, 0, 1, 1], [], []>} : vector<64x384xbf16>, vector<384x128xbf16>, vector<64x128xf32> -> vector<64x128xf32>
    %72 = arith.addf %66, %71 : vector<64x128xf32>
    %c2_45 = arith.constant 2 : index
    %c0_46 = arith.constant 0 : index
    %c0_47 = arith.constant 0 : index
    %73 = vector.load %arg13[%c2_45, %c0_46, %c0_47] : memref<10x8x384xbf16, #tpu.memory_space<vmem>>, vector<8x8x384xbf16>
    %74 = vector.shape_cast %73 : vector<8x8x384xbf16> to vector<64x384xbf16>
    %c2_48 = arith.constant 2 : index
    %c0_49 = arith.constant 0 : index
    %c0_50 = arith.constant 0 : index
    %75 = vector.load %arg7[%c2_48, %c0_49, %c0_50] : memref<3x384x128xbf16, #tpu.memory_space<vmem>>, vector<1x384x128xbf16>
    %76 = vector.shape_cast %75 : vector<1x384x128xbf16> to vector<384x128xbf16>
    %cst_51 = arith.constant dense<0.000000e+00> : vector<64x128xf32>
    %77 = tpu.matmul %74, %76, %cst_51 {dimension_numbers = #tpu.dot_dimension_numbers<[1], [0], [0], [1], [0, 0, 1, 1], [], []>} : vector<64x384xbf16>, vector<384x128xbf16>, vector<64x128xf32> -> vector<64x128xf32>
    %78 = arith.addf %72, %77 : vector<64x128xf32>
    %c0_52 = arith.constant 0 : index
    %c0_53 = arith.constant 0 : index
    %79 = vector.load %arg8[%c0_52, %c0_53] : memref<3x128xf32, #tpu.memory_space<vmem>>, vector<1x128xf32>
    %80 = vector.broadcast %79 : vector<1x128xf32> to vector<64x128xf32>
    %81 = arith.addf %78, %80 : vector<64x128xf32>
    %cst_54 = arith.constant 0.000000e+00 : f32
    %82 = vector.broadcast %cst_54 : f32 to vector<64x128xf32>
    %83 = arith.cmpf oge, %81, %82 : vector<64x128xf32>
    %84 = vector.broadcast %0 : f32 to vector<64x128xf32>
    %85 = arith.mulf %84, %81 : vector<64x128xf32>
    %86 = arith.select %83, %81, %85 : vector<64x128xi1>, vector<64x128xf32>
    %c1_55 = arith.constant 1 : index
    %c0_56 = arith.constant 0 : index
    %87 = vector.load %arg8[%c1_55, %c0_56] : memref<3x128xf32, #tpu.memory_space<vmem>>, vector<1x128xf32>
    %88 = vector.broadcast %87 : vector<1x128xf32> to vector<64x128xf32>
    %89 = arith.mulf %86, %88 : vector<64x128xf32>
    %c2_57 = arith.constant 2 : index
    %c0_58 = arith.constant 0 : index
    %90 = vector.load %arg8[%c2_57, %c0_58] : memref<3x128xf32, #tpu.memory_space<vmem>>, vector<1x128xf32>
    %91 = vector.broadcast %90 : vector<1x128xf32> to vector<64x128xf32>
    %92 = arith.addf %89, %91 : vector<64x128xf32>
    %93 = arith.truncf %92 : vector<64x128xf32> to vector<64x128xbf16>
    %c0_59 = arith.constant 0 : index
    %c0_60 = arith.constant 0 : index
    %94 = vector.load %arg9[%c0_59, %c0_60] : memref<128x128xbf16, #tpu.memory_space<vmem>>, vector<128x128xbf16>
    %cst_61 = arith.constant dense<0.000000e+00> : vector<64x128xf32>
    %95 = tpu.matmul %93, %94, %cst_61 {dimension_numbers = #tpu.dot_dimension_numbers<[1], [0], [0], [1], [0, 0, 1, 1], [], []>} : vector<64x128xbf16>, vector<128x128xbf16>, vector<64x128xf32> -> vector<64x128xf32>
    %c0_62 = arith.constant 0 : index
    %c0_63 = arith.constant 0 : index
    %96 = vector.load %arg10[%c0_62, %c0_63] : memref<3x128xf32, #tpu.memory_space<vmem>>, vector<1x128xf32>
    %97 = vector.broadcast %96 : vector<1x128xf32> to vector<64x128xf32>
    %98 = arith.addf %95, %97 : vector<64x128xf32>
    %cst_64 = arith.constant 0.000000e+00 : f32
    %99 = vector.broadcast %cst_64 : f32 to vector<64x128xf32>
    %100 = arith.cmpf oge, %98, %99 : vector<64x128xf32>
    %101 = vector.broadcast %0 : f32 to vector<64x128xf32>
    %102 = arith.mulf %101, %98 : vector<64x128xf32>
    %103 = arith.select %100, %98, %102 : vector<64x128xi1>, vector<64x128xf32>
    %c1_65 = arith.constant 1 : index
    %c0_66 = arith.constant 0 : index
    %104 = vector.load %arg10[%c1_65, %c0_66] : memref<3x128xf32, #tpu.memory_space<vmem>>, vector<1x128xf32>
    %105 = vector.broadcast %104 : vector<1x128xf32> to vector<64x128xf32>
    %106 = arith.mulf %103, %105 : vector<64x128xf32>
    %c2_67 = arith.constant 2 : index
    %c0_68 = arith.constant 0 : index
    %107 = vector.load %arg10[%c2_67, %c0_68] : memref<3x128xf32, #tpu.memory_space<vmem>>, vector<1x128xf32>
    %108 = vector.broadcast %107 : vector<1x128xf32> to vector<64x128xf32>
    %109 = arith.addf %106, %108 : vector<64x128xf32>
    %110 = vector.extract_strided_slice %109 {offsets = [0, 0], sizes = [64, 8], strides = [1, 1]} : vector<64x128xf32> to vector<64x8xf32>
    %c0_69 = arith.constant 0 : index
    %c0_70 = arith.constant 0 : index
    %c1_71 = arith.constant 1 : index
    %c0_72 = arith.constant 0 : index
    %111 = vector.load %arg3[%c0_69, %c0_70, %c1_71, %c0_72] : memref<1x8x16x16xf32, #tpu.memory_space<vmem>>, vector<1x8x8x16xf32>
    %112 = vector.shape_cast %111 : vector<1x8x8x16xf32> to vector<8x8x16xf32>
    %113 = vector.shape_cast %112 : vector<8x8x16xf32> to vector<64x16xf32>
    %114 = vector.extract_strided_slice %113 {offsets = [0, 0], sizes = [64, 4], strides = [1, 1]} : vector<64x16xf32> to vector<64x4xf32>
    %115 = vector.extract_strided_slice %113 {offsets = [0, 4], sizes = [64, 4], strides = [1, 1]} : vector<64x16xf32> to vector<64x4xf32>
    %116 = arith.maximumf %114, %115 : vector<64x4xf32>
    %117 = vector.extract_strided_slice %113 {offsets = [0, 8], sizes = [64, 4], strides = [1, 1]} : vector<64x16xf32> to vector<64x4xf32>
    %118 = vector.extract_strided_slice %113 {offsets = [0, 12], sizes = [64, 4], strides = [1, 1]} : vector<64x16xf32> to vector<64x4xf32>
    %119 = arith.maximumf %117, %118 : vector<64x4xf32>
    %120 = arith.maximumf %116, %119 : vector<64x4xf32>
    %cst_73 = arith.constant 0.000000e+00 : f32
    %121 = vector.broadcast %cst_73 : f32 to vector<64x4xf32>
    %122 = tpu.concatenate %120, %121 in 1 : vector<64x4xf32>, vector<64x4xf32> -> vector<64x8xf32>
    %123 = arith.addf %110, %122 : vector<64x8xf32>
    %124 = vector.shape_cast %123 : vector<64x8xf32> to vector<8x8x8xf32>
    %c0_74 = arith.constant 0 : index
    %c0_75 = arith.constant 0 : index
    %c0_76 = arith.constant 0 : index
    %c0_77 = arith.constant 0 : index
    %125 = vector.load %arg12[%c0_74, %c0_75, %c0_76, %c0_77] : memref<1x8x8x8xf32, #tpu.memory_space<vmem>>, vector<1x8x8x8xf32>
    %126 = vector.shape_cast %125 : vector<1x8x8x8xf32> to vector<8x8x8xf32>
    %127 = vector.shape_cast %124 : vector<8x8x8xf32> to vector<1x8x8x8xf32>
    tpu.vector_store %arg12[%c0_74, %c0_75, %c0_76, %c0_77], %127 {strides = array<i32>} : memref<1x8x8x8xf32, #tpu.memory_space<vmem>>, vector<1x8x8x8xf32>,
    return
  }
  func.func @transform_0(%arg0: i32, %arg1: i32) -> (i32, i32, i32, i32) {
    %c8_i32 = arith.constant 8 : i32
    %0 = arith.muli %arg1, %c8_i32 : i32
    %c1_i32 = arith.constant 1 : i32
    %1 = arith.subi %0, %c1_i32 : i32
    %c0_i32 = arith.constant 0 : i32
    %2 = arith.maxsi %1, %c0_i32 : i32
    %c0_i32_0 = arith.constant 0 : i32
    %c0_i32_1 = arith.constant 0 : i32
    %c0_i32_2 = arith.constant 0 : i32
    return %arg0, %2, %c0_i32_0, %c0_i32_1 : i32, i32, i32, i32
  }
  func.func @transform_1(%arg0: i32, %arg1: i32) -> (i32, i32, i32, i32) {
    %c0_i32 = arith.constant 0 : i32
    %c0_i32_0 = arith.constant 0 : i32
    %c0_i32_1 = arith.constant 0 : i32
    return %arg0, %arg1, %c0_i32, %c0_i32_0 : i32, i32, i32, i32
  }
  func.func @transform_2(%arg0: i32, %arg1: i32) -> (i32, i32, i32, i32) {
    %c1_i32 = arith.constant 1 : i32
    %0 = arith.addi %arg1, %c1_i32 : i32
    %c8_i32 = arith.constant 8 : i32
    %1 = arith.muli %0, %c8_i32 : i32
    %c7_i32 = arith.constant 7 : i32
    %2 = arith.minsi %1, %c7_i32 : i32
    %c0_i32 = arith.constant 0 : i32
    %c0_i32_0 = arith.constant 0 : i32
    %c0_i32_1 = arith.constant 0 : i32
    return %arg0, %2, %c0_i32, %c0_i32_0 : i32, i32, i32, i32
  }
  func.func @transform_3(%arg0: i32, %arg1: i32) -> (i32, i32) {
    %c0_i32 = arith.constant 0 : i32
    %c0_i32_0 = arith.constant 0 : i32
    %c0_i32_1 = arith.constant 0 : i32
    return %c0_i32, %c0_i32_0 : i32, i32
  }
  func.func @transform_4(%arg0: i32, %arg1: i32) -> (i32, i32) {
    %c0_i32 = arith.constant 0 : i32
    %c0_i32_0 = arith.constant 0 : i32
    %c0_i32_1 = arith.constant 0 : i32
    return %c0_i32, %c0_i32_0 : i32, i32
  }
  func.func @transform_5(%arg0: i32, %arg1: i32) -> (i32, i32, i32) {
    %c0_i32 = arith.constant 0 : i32
    %c0_i32_0 = arith.constant 0 : i32
    %c0_i32_1 = arith.constant 0 : i32
    %c0_i32_2 = arith.constant 0 : i32
    return %c0_i32, %c0_i32_0, %c0_i32_1 : i32, i32, i32
  }
  func.func @transform_6(%arg0: i32, %arg1: i32) -> (i32, i32) {
    %c0_i32 = arith.constant 0 : i32
    %c0_i32_0 = arith.constant 0 : i32
    %c0_i32_1 = arith.constant 0 : i32
    return %c0_i32, %c0_i32_0 : i32, i32
  }
  func.func @transform_7(%arg0: i32, %arg1: i32) -> (i32, i32) {
    %c0_i32 = arith.constant 0 : i32
    %c0_i32_0 = arith.constant 0 : i32
    %c0_i32_1 = arith.constant 0 : i32
    return %c0_i32, %c0_i32_0 : i32, i32
  }
  func.func @transform_8(%arg0: i32, %arg1: i32) -> (i32, i32) {
    %c0_i32 = arith.constant 0 : i32
    %c0_i32_0 = arith.constant 0 : i32
    %c0_i32_1 = arith.constant 0 : i32
    return %c0_i32, %c0_i32_0 : i32, i32
  }
  func.func @transform_9(%arg0: i32, %arg1: i32) -> i32 {
    %c0_i32 = arith.constant 0 : i32
    %c0_i32_0 = arith.constant 0 : i32
    return %c0_i32 : i32
  }
  func.func @transform_10(%arg0: i32, %arg1: i32) -> (i32, i32, i32, i32) {
    %c0_i32 = arith.constant 0 : i32
    %c0_i32_0 = arith.constant 0 : i32
    %c0_i32_1 = arith.constant 0 : i32
    return %arg0, %arg1, %c0_i32, %c0_i32_0 : i32, i32, i32, i32
  }
}

</mosaic_0001>

<llo_original>
// kernel: downsample_block_forward.1
$region0: #{downsample_block_forward.1}
  #allocation0 [shape = 'u32[]', space=smem, size = 0x4, offset = 0x4, fixed_abs, tag = 'smem constant byte address 0x4 - core index']
  #allocation1 [shape = 'u32[144,128]{1,0:T(1,128)}', space=vmem, size = 0x12000, scoped, tag = 'internal scratch']
  #allocation2 [shape = 'bf16[10,8,384]{2,1,0:T(8,128)(2,1)}', space=vmem, size = 0xf000, scoped, tag = 'scratch operand']
  #allocation3 [shape = 'f32[1]{0:T(128)S(6)}', space=smem, size = 0x200, scoped, tag = 'scoped memory for downsample_block_forward.1']
  %s0 = inlined_call_operand.vmem [shape: f32[2,8,16,16], index: 0, kind: input, shape index: {}, may-alias: {0,1,2}]
  %s1 = inlined_call_operand.vmem [shape: f32[2,8,16,16], index: 1, kind: input, shape index: {}, may-alias: {0,1,2}]
  %s2 = inlined_call_operand.vmem [shape: f32[2,8,16,16], index: 2, kind: input, shape index: {}, may-alias: {0,1,2}]
  %s3 = inlined_call_operand.vmem [shape: bf16[16,128], index: 3, kind: input, shape index: {}]
  %s4 = inlined_call_operand.vmem [shape: f32[3,128], index: 4, kind: input, shape index: {}]
  %s5 = inlined_call_operand.vmem [shape: bf16[3,384,128], index: 5, kind: input, shape index: {}]
  %s6 = inlined_call_operand.vmem [shape: f32[3,128], index: 6, kind: input, shape index: {}]
  %s7 = inlined_call_operand.vmem [shape: bf16[128,128], index: 7, kind: input, shape index: {}]
  %s8 = inlined_call_operand.vmem [shape: f32[3,128], index: 8, kind: input, shape index: {}]
  %s9 = inlined_call_operand.<no memory space> [shape: f32[1], index: 9, kind: input, shape index: {}]
  %s10 = inlined_call_operand.vmem [shape: f32[2,8,8,8], index: 10, kind: output, shape index: {}]
  %s11 = sld [smem:[#allocation0]]
  $region73: #{downsample_block_forward.1} parent=0
    _
  %s13 = ssub.s32 1, %s11
  %s14 = scalar_select 0, %s13, %s11
  %15 = sst [smem:[#allocation3]] %s9
  loop: start=0, step=1, limit=4
  $region2: #{downsample_block_forward.1} parent=0 // loop_pre_header
    _
  $region3: #{downsample_block_forward.1} parent=0 // loop_header
    %s17 = sphi 0, %s21
    %p18 = scmp.ge.s32.totalorder %s17, 4
    %s24 = sphi 0, %s36
    %s25 = sphi 0, %s32
    %s26 = sphi 0, %s24
    %s27 = sphi 0, %s25
    %s28 = sphi 0, %s26
    %s29 = sphi 0, %s27
    %s49 = sphi 0, %s51
    %s52 = sphi 0, %s49
    %s53 = sphi 0, %s52
    %s69 = sphi 0, %s53
    %s77 = sphi 0, %s79
    %s80 = sphi 0, %s77
    %s81 = sphi 0, %s80
    %s97 = sphi 0, %s81
    %s113 = sphi 0, %s115
    %s116 = sphi 0, %s113
    %s117 = sphi 0, %s116
    %s133 = sphi 0, %s117
    %s137 = sphi 0, %s137
    %s139 = sphi 0, %s137
    %s140 = sphi 0, %s139
    %s154 = sphi 0, %s140
    %s158 = sphi 0, %s158
    %s160 = sphi 0, %s158
    %s161 = sphi 0, %s160
    %s175 = sphi 0, %s161
    %s179 = sphi 0, %s179
    %s181 = sphi 0, %s179
    %s182 = sphi 0, %s181
    %s196 = sphi 0, %s182
    %s200 = sphi 0, %s200
    %s202 = sphi 0, %s200
    %s203 = sphi 0, %s202
    %s217 = sphi 0, %s203
    %s221 = sphi 0, %s221
    %s223 = sphi 0, %s221
    %s224 = sphi 0, %s223
    %s238 = sphi 0, %s224
    %s242 = sphi 0, %s242
    %s244 = sphi 0, %s242
    %s245 = sphi 0, %s244
    %s259 = sphi 0, %s245
    %s263 = sphi 0, %s263
    %s265 = sphi 0, %s263
    %s266 = sphi 0, %s265
    %s280 = sphi 0, %s266
    %s288 = sphi 0, %s290
    %s291 = sphi 0, %s288
    %s292 = sphi 0, %s291
    %s308 = sphi 0, %s292
  $region4: #{downsample_block_forward.1} parent=0 // loop_header_branch
    %20 = sbr.rel (%p18) target = $region8
  $region5: #{downsample_block_forward.1} parent=0 // loop_body
    %s22 = ssub.s32 %s17, 1
    %s23 = ssub.s32 %s17, 2
    %s30 = sadd.s32 1, %s25
    %p31 = scmp.ge.s32.totalorder %s30, 1
    %s32 = scalar_select %p31, 0, %s30
    %s33 = sadd.s32 1, %s24
    %s34 = scalar_select %p31, %s33, %s24
    %p35 = scmp.ge.s32.totalorder %s34, 2
    %s36 = scalar_select %p35, 0, %s34
    %s37 = smul.u32 %s25, 8
    %s38 = ssub.s32 %s37, 1
    %p39 = scmp.gt.s32.totalorder %s38, 0
    %s40 = scalar_select %p39, %s38, 0
    %s41 = smul.u32 %s32, 8
    %s42 = ssub.s32 %s41, 1
    %p43 = scmp.gt.s32.totalorder %s42, 0
    %s44 = scalar_select %p43, %s42, 0
    %s45 = ssub.s32 %s24, %s36
    %s46 = ssub.s32 %s40, %s44
    %s47 = sor.u32 %s45, %s46
    %p48 = scmp.eq.s32.totalorder %s47, 0
    %s50 = sadd.s32 %s49, 1
    %s51 = scalar_select %p48, %s49, %s50
    %p54 = pneg %p48
    %p55 = scmp.eq.s32.totalorder %s17, 1
    %p56 = por %p54, %p55
    %p57 = scmp.ne.s32.totalorder %s49, %s52
    %p58 = scmp.eq.s32.totalorder %s17, 0
    %p59 = por %p57, %p58
    %p60 = scmp.ne.s32.totalorder %s49, %s52
    %p61 = scmp.eq.s32.totalorder %s22, 1
    %p62 = por %p60, %p61
    %p63 = scmp.ne.s32.totalorder %s52, %s53
    %p64 = scmp.eq.s32.totalorder %s22, 0
    %p65 = por %p63, %p64
    %p66 = scmp.ne.s32.totalorder %s52, %s53
    %p67 = scmp.eq.s32.totalorder %s23, 1
    %p68 = por %p66, %p67
    %p70 = scmp.ne.s32.totalorder %s53, %s69
    %p71 = scmp.eq.s32.totalorder %s23, 0
    %p72 = por %p70, %p71
    %s73 = ssub.s32 %s24, %s36
    %s74 = ssub.s32 %s25, %s32
    %s75 = sor.u32 %s73, %s74
    %p76 = scmp.eq.s32.totalorder %s75, 0
    %s78 = sadd.s32 %s77, 1
    %s79 = scalar_select %p76, %s77, %s78
    %p82 = pneg %p76
    %p83 = scmp.eq.s32.totalorder %s17, 1
    %p84 = por %p82, %p83
    %p85 = scmp.ne.s32.totalorder %s77, %s80
    %p86 = scmp.eq.s32.totalorder %s17, 0
    %p87 = por %p85, %p86
    %p88 = scmp.ne.s32.totalorder %s77, %s80
    %p89 = scmp.eq.s32.totalorder %s22, 1
    %p90 = por %p88, %p89
    %p91 = scmp.ne.s32.totalorder %s80, %s81
    %p92 = scmp.eq.s32.totalorder %s22, 0
    %p93 = por %p91, %p92
    %p94 = scmp.ne.s32.totalorder %s80, %s81
    %p95 = scmp.eq.s32.totalorder %s23, 1
    %p96 = por %p94, %p95
    %p98 = scmp.ne.s32.totalorder %s81, %s97
    %p99 = scmp.eq.s32.totalorder %s23, 0
    %p100 = por %p98, %p99
    %s101 = sadd.s32 %s25, 1
    %s102 = smul.u32 %s101, 8
    %p103 = scmp.lt.s32.totalorder %s102, 7
    %s104 = scalar_select %p103, %s102, 7
    %s105 = sadd.s32 %s32, 1
    %s106 = smul.u32 %s105, 8
    %p107 = scmp.lt.s32.totalorder %s106, 7
    %s108 = scalar_select %p107, %s106, 7
    %s109 = ssub.s32 %s24, %s36
    %s110 = ssub.s32 %s104, %s108
    %s111 = sor.u32 %s109, %s110
    %p112 = scmp.eq.s32.totalorder %s111, 0
    %s114 = sadd.s32 %s113, 1
    %s115 = scalar_select %p112, %s113, %s114
    %p118 = pneg %p112
    %p119 = scmp.eq.s32.totalorder %s17, 1
    %p120 = por %p118, %p119
    %p121 = scmp.ne.s32.totalorder %s113, %s116
    %p122 = scmp.eq.s32.totalorder %s17, 0
    %p123 = por %p121, %p122
    %p124 = scmp.ne.s32.totalorder %s113, %s116
    %p125 = scmp.eq.s32.totalorder %s22, 1
    %p126 = por %p124, %p125
    %p127 = scmp.ne.s32.totalorder %s116, %s117
    %p128 = scmp.eq.s32.totalorder %s22, 0
    %p129 = por %p127, %p128
    %p130 = scmp.ne.s32.totalorder %s116, %s117
    %p131 = scmp.eq.s32.totalorder %s23, 1
    %p132 = por %p130, %p131
    %p134 = scmp.ne.s32.totalorder %s117, %s133
    %p135 = scmp.eq.s32.totalorder %s23, 0
    %p136 = por %p134, %p135
    %s138 = sadd.s32 %s137, 1
    %p141 = scmp.eq.s32.totalorder %s17, 1
    %p142 = scmp.ne.s32.totalorder %s137, %s139
    %p143 = scmp.eq.s32.totalorder %s17, 0
    %p144 = por %p142, %p143
    %p145 = scmp.ne.s32.totalorder %s137, %s139
    %p146 = scmp.eq.s32.totalorder %s22, 1
    %p147 = por %p145, %p146
    %p148 = scmp.ne.s32.totalorder %s139, %s140
    %p149 = scmp.eq.s32.totalorder %s22, 0
    %p150 = por %p148, %p149
    %p151 = scmp.ne.s32.totalorder %s139, %s140
    %p152 = scmp.eq.s32.totalorder %s23, 1
    %p153 = por %p151, %p152
    %p155 = scmp.ne.s32.totalorder %s140, %s154
    %p156 = scmp.eq.s32.totalorder %s23, 0
    %p157 = por %p155, %p156
    %s159 = sadd.s32 %s158, 1
    %p162 = scmp.eq.s32.totalorder %s17, 1
    %p163 = scmp.ne.s32.totalorder %s158, %s160
    %p164 = scmp.eq.s32.totalorder %s17, 0
    %p165 = por %p163, %p164
    %p166 = scmp.ne.s32.totalorder %s158, %s160
    %p167 = scmp.eq.s32.totalorder %s22, 1
    %p168 = por %p166, %p167
    %p169 = scmp.ne.s32.totalorder %s160, %s161
    %p170 = scmp.eq.s32.totalorder %s22, 0
    %p171 = por %p169, %p170
    %p172 = scmp.ne.s32.totalorder %s160, %s161
    %p173 = scmp.eq.s32.totalorder %s23, 1
    %p174 = por %p172, %p173
    %p176 = scmp.ne.s32.totalorder %s161, %s175
    %p177 = scmp.eq.s32.totalorder %s23, 0
    %p178 = por %p176, %p177
    %s180 = sadd.s32 %s179, 1
    %p183 = scmp.eq.s32.totalorder %s17, 1
    %p184 = scmp.ne.s32.totalorder %s179, %s181
    %p185 = scmp.eq.s32.totalorder %s17, 0
    %p186 = por %p184, %p185
    %p187 = scmp.ne.s32.totalorder %s179, %s181
    %p188 = scmp.eq.s32.totalorder %s22, 1
    %p189 = por %p187, %p188
    %p190 = scmp.ne.s32.totalorder %s181, %s182
    %p191 = scmp.eq.s32.totalorder %s22, 0
    %p192 = por %p190, %p191
    %p193 = scmp.ne.s32.totalorder %s181, %s182
    %p194 = scmp.eq.s32.totalorder %s23, 1
    %p195 = por %p193, %p194
    %p197 = scmp.ne.s32.totalorder %s182, %s196
    %p198 = scmp.eq.s32.totalorder %s23, 0
    %p199 = por %p197, %p198
    %s201 = sadd.s32 %s200, 1
    %p204 = scmp.eq.s32.totalorder %s17, 1
    %p205 = scmp.ne.s32.totalorder %s200, %s202
    %p206 = scmp.eq.s32.totalorder %s17, 0
    %p207 = por %p205, %p206
    %p208 = scmp.ne.s32.totalorder %s200, %s202
    %p209 = scmp.eq.s32.totalorder %s22, 1
    %p210 = por %p208, %p209
    %p211 = scmp.ne.s32.totalorder %s202, %s203
    %p212 = scmp.eq.s32.totalorder %s22, 0
    %p213 = por %p211, %p212
    %p214 = scmp.ne.s32.totalorder %s202, %s203
    %p215 = scmp.eq.s32.totalorder %s23, 1
    %p216 = por %p214, %p215
    %p218 = scmp.ne.s32.totalorder %s203, %s217
    %p219 = scmp.eq.s32.totalorder %s23, 0
    %p220 = por %p218, %p219
    %s222 = sadd.s32 %s221, 1
    %p225 = scmp.eq.s32.totalorder %s17, 1
    %p226 = scmp.ne.s32.totalorder %s221, %s223
    %p227 = scmp.eq.s32.totalorder %s17, 0
    %p228 = por %p226, %p227
    %p229 = scmp.ne.s32.totalorder %s221, %s223
    %p230 = scmp.eq.s32.totalorder %s22, 1
    %p231 = por %p229, %p230
    %p232 = scmp.ne.s32.totalorder %s223, %s224
    %p233 = scmp.eq.s32.totalorder %s22, 0
    %p234 = por %p232, %p233
    %p235 = scmp.ne.s32.totalorder %s223, %s224
    %p236 = scmp.eq.s32.totalorder %s23, 1
    %p237 = por %p235, %p236
    %p239 = scmp.ne.s32.totalorder %s224, %s238
    %p240 = scmp.eq.s32.totalorder %s23, 0
    %p241 = por %p239, %p240
    %s243 = sadd.s32 %s242, 1
    %p246 = scmp.eq.s32.totalorder %s17, 1
    %p247 = scmp.ne.s32.totalorder %s242, %s244
    %p248 = scmp.eq.s32.totalorder %s17, 0
    %p249 = por %p247, %p248
    %p250 = scmp.ne.s32.totalorder %s242, %s244
    %p251 = scmp.eq.s32.totalorder %s22, 1
    %p252 = por %p250, %p251
    %p253 = scmp.ne.s32.totalorder %s244, %s245
    %p254 = scmp.eq.s32.totalorder %s22, 0
    %p255 = por %p253, %p254
    %p256 = scmp.ne.s32.totalorder %s244, %s245
    %p257 = scmp.eq.s32.totalorder %s23, 1
    %p258 = por %p256, %p257
    %p260 = scmp.ne.s32.totalorder %s245, %s259
    %p261 = scmp.eq.s32.totalorder %s23, 0
    %p262 = por %p260, %p261
    %s264 = sadd.s32 %s263, 1
    %p267 = scmp.eq.s32.totalorder %s17, 1
    %p268 = scmp.ne.s32.totalorder %s263, %s265
    %p269 = scmp.eq.s32.totalorder %s17, 0
    %p270 = por %p268, %p269
    %p271 = scmp.ne.s32.totalorder %s263, %s265
    %p272 = scmp.eq.s32.totalorder %s22, 1
    %p273 = por %p271, %p272
    %p274 = scmp.ne.s32.totalorder %s265, %s266
    %p275 = scmp.eq.s32.totalorder %s22, 0
    %p276 = por %p274, %p275
    %p277 = scmp.ne.s32.totalorder %s265, %s266
    %p278 = scmp.eq.s32.totalorder %s23, 1
    %p279 = por %p277, %p278
    %p281 = scmp.ne.s32.totalorder %s266, %s280
    %p282 = scmp.eq.s32.totalorder %s23, 0
    %p283 = por %p281, %p282
    %s284 = ssub.s32 %s24, %s36
    %s285 = ssub.s32 %s25, %s32
    %s286 = sor.u32 %s284, %s285
    %p287 = scmp.eq.s32.totalorder %s286, 0
    %s289 = sadd.s32 %s288, 1
    %s290 = scalar_select %p287, %s288, %s289
    %p293 = pneg %p287
    %p294 = scmp.eq.s32.totalorder %s17, 1
    %p295 = por %p293, %p294
    %p296 = scmp.ne.s32.totalorder %s288, %s291
    %p297 = scmp.eq.s32.totalorder %s17, 0
    %p298 = por %p296, %p297
    %p299 = scmp.ne.s32.totalorder %s288, %s291
    %p300 = scmp.eq.s32.totalorder %s22, 1
    %p301 = por %p299, %p300
    %p302 = scmp.ne.s32.totalorder %s291, %s292
    %p303 = scmp.eq.s32.totalorder %s22, 0
    %p304 = por %p302, %p303
    %p305 = scmp.ne.s32.totalorder %s291, %s292
    %p306 = scmp.eq.s32.totalorder %s23, 1
    %p307 = por %p305, %p306
    %p309 = scmp.ne.s32.totalorder %s292, %s308
    %p310 = scmp.eq.s32.totalorder %s23, 0
    %p311 = por %p309, %p310
    %p312 = scmp.le.s32.totalorder 1, %s17
    %p313 = scmp.lt.s32.totalorder %s17, 3
    %p314 = pnand %p312, %p313
    %p315 = pneg %p314
    // Predicated region
    $region9: #{downsample_block_forward.1} parent=5 // pred_check
      _
    $region10: #{downsample_block_forward.1} parent=5 // pred_check_branch
      %317 = sbr.rel (%p314) target = $region12
    $region11: #{downsample_block_forward.1} parent=5 // pred_region
      %s318 = ssub.s32 %s17, 1
      // Predicated region
      $region13: #{downsample_block_forward.1} parent=11 // pred_check
        %p319 = pneg %p150
      $region14: #{downsample_block_forward.1} parent=11 // pred_check_branch
        %321 = sbr.rel (%p319) target = $region16
      $region15: #{downsample_block_forward.1} parent=11 // pred_region
        _
      $region16: #{downsample_block_forward.1} parent=11 // pred_fallthru
        _
      // Predicated region
      $region17: #{downsample_block_forward.1} parent=11 // pred_check
        %p322 = pneg %p171
      $region18: #{downsample_block_forward.1} parent=11 // pred_check_branch
        %324 = sbr.rel (%p322) target = $region20
      $region19: #{downsample_block_forward.1} parent=11 // pred_region
        _
      $region20: #{downsample_block_forward.1} parent=11 // pred_fallthru
        _
      // Predicated region
      $region21: #{downsample_block_forward.1} parent=11 // pred_check
        %p325 = pneg %p192
      $region22: #{downsample_block_forward.1} parent=11 // pred_check_branch
        %327 = sbr.rel (%p325) target = $region24
      $region23: #{downsample_block_forward.1} parent=11 // pred_region
        _
      $region24: #{downsample_block_forward.1} parent=11 // pred_fallthru
        _
      // Predicated region
      $region25: #{downsample_block_forward.1} parent=11 // pred_check
        %p328 = pneg %p213
      $region26: #{downsample_block_forward.1} parent=11 // pred_check_branch
        %330 = sbr.rel (%p328) target = $region28
      $region27: #{downsample_block_forward.1} parent=11 // pred_region
        _
      $region28: #{downsample_block_forward.1} parent=11 // pred_fallthru
        _
      // Predicated region
      $region29: #{downsample_block_forward.1} parent=11 // pred_check
        %p331 = pneg %p234
      $region30: #{downsample_block_forward.1} parent=11 // pred_check_branch
        %333 = sbr.rel (%p331) target = $region32
      $region31: #{downsample_block_forward.1} parent=11 // pred_region
        _
      $region32: #{downsample_block_forward.1} parent=11 // pred_fallthru
        _
      // Predicated region
      $region33: #{downsample_block_forward.1} parent=11 // pred_check
        %p334 = pneg %p255
      $region34: #{downsample_block_forward.1} parent=11 // pred_check_branch
        %336 = sbr.rel (%p334) target = $region36
      $region35: #{downsample_block_forward.1} parent=11 // pred_region
        _
      $region36: #{downsample_block_forward.1} parent=11 // pred_fallthru
        _
      // Predicated region
      $region37: #{downsample_block_forward.1} parent=11 // pred_check
        %p337 = pneg %p276
      $region38: #{downsample_block_forward.1} parent=11 // pred_check_branch
        %339 = sbr.rel (%p337) target = $region40
      $region39: #{downsample_block_forward.1} parent=11 // pred_region
        _
      $region40: #{downsample_block_forward.1} parent=11 // pred_fallthru
        _
    $region12: #{downsample_block_forward.1} parent=5 // pred_fallthru
      _
    %p340 = scmp.lt.s32.totalorder %s17, 2
    // Predicated region
    $region41: #{downsample_block_forward.1} parent=5 // pred_check
      %p341 = pneg %p340
    $region42: #{downsample_block_forward.1} parent=5 // pred_check_branch
      %343 = sbr.rel (%p341) target = $region44
    $region43: #{downsample_block_forward.1} parent=5 // pred_region
      // Predicated region
      $region45: #{downsample_block_forward.1} parent=43 // pred_check
        %p344 = pneg %p59
      $region46: #{downsample_block_forward.1} parent=43 // pred_check_branch
        %346 = sbr.rel (%p344) target = $region48
      $region47: #{downsample_block_forward.1} parent=43 // pred_region
        %s347 = smul.u32 %s25, 8
        %s348 = ssub.s32 %s347, 1
        %p349 = scmp.gt.s32.totalorder %s348, 0
        %s350 = scalar_select %p349, %s348, 0
        %p351 = scmp.lt.s32.totalorder %s24, 1
        %s352 = scalar_select %p351, %s24, 1
        %p353 = scmp.lt.s32.totalorder %s350, 7
        %s354 = scalar_select %p353, %s350, 7
        %s355 = smul.addr %s354, 2
        %s356 = smul.addr %s352, 16
        %s357 = sadd.s32 %s355, %s356
        %s358 = smul.addr %s357, 8
        %s359 = scalar_lea.vmem %s0, %s358
        %s360 = smul.u32 %s25, 8
        %s361 = ssub.s32 %s360, 1
        %p362 = scmp.gt.s32.totalorder %s361, 0
        %s363 = scalar_select %p362, %s361, 0
      $region48: #{downsample_block_forward.1} parent=43 // pred_fallthru
        _
      // Predicated region
      $region49: #{downsample_block_forward.1} parent=43 // pred_check
        %p364 = pneg %p87
      $region50: #{downsample_block_forward.1} parent=43 // pred_check_branch
        %366 = sbr.rel (%p364) target = $region52
      $region51: #{downsample_block_forward.1} parent=43 // pred_region
        %s367 = smul.u32 8, %s25
        %p368 = scmp.lt.s32.totalorder %s24, 1
        %s369 = scalar_select %p368, %s24, 1
        %p370 = scmp.lt.s32.totalorder %s367, 7
        %s371 = scalar_select %p370, %s367, 7
        %s372 = smul.addr %s371, 2
        %s373 = smul.addr %s369, 16
        %s374 = sadd.s32 %s372, %s373
        %s375 = smul.addr %s374, 8
        %s376 = scalar_lea.vmem %s1, %s375
        %s377 = smul.u32 8, %s25
      $region52: #{downsample_block_forward.1} parent=43 // pred_fallthru
        _
      // Predicated region
      $region53: #{downsample_block_forward.1} parent=43 // pred_check
        %p378 = pneg %p123
      $region54: #{downsample_block_forward.1} parent=43 // pred_check_branch
        %380 = sbr.rel (%p378) target = $region56
      $region55: #{downsample_block_forward.1} parent=43 // pred_region
        %s381 = sadd.s32 %s25, 1
        %s382 = smul.u32 %s381, 8
        %p383 = scmp.lt.s32.totalorder %s382, 7
        %s384 = scalar_select %p383, %s382, 7
        %p385 = scmp.lt.s32.totalorder %s24, 1
        %s386 = scalar_select %p385, %s24, 1
        %p387 = scmp.lt.s32.totalorder %s384, 7
        %s388 = scalar_select %p387, %s384, 7
        %s389 = smul.addr %s388, 2
        %s390 = smul.addr %s386, 16
        %s391 = sadd.s32 %s389, %s390
        %s392 = smul.addr %s391, 8
        %s393 = scalar_lea.vmem %s2, %s392
        %s394 = sadd.s32 %s25, 1
        %s395 = smul.u32 %s394, 8
        %p396 = scmp.lt.s32.totalorder %s395, 7
        %s397 = scalar_select %p396, %s395, 7
      $region56: #{downsample_block_forward.1} parent=43 // pred_fallthru
        _
    $region44: #{downsample_block_forward.1} parent=5 // pred_fallthru
      _
    %p398 = scmp.le.s32.totalorder 1, %s17
    %p399 = scmp.lt.s32.totalorder %s17, 3
    %p400 = pnand %p398, %p399
    %p401 = pneg %p400
    // Predicated region
    $region57: #{downsample_block_forward.1} parent=5 // pred_check
      _
    $region58: #{downsample_block_forward.1} parent=5 // pred_check_branch
      %403 = sbr.rel (%p400) target = $region60
    $region59: #{downsample_block_forward.1} parent=5 // pred_region
      %s404 = ssub.s32 %s17, 1
      %s405 = smul.u32 %s27, 8
      %s406 = ssub.s32 %s405, 1
      %p407 = scmp.gt.s32.totalorder %s406, 0
      %s408 = scalar_select %p407, %s406, 0
      %p409 = scmp.lt.s32.totalorder %s26, 1
      %s410 = scalar_select %p409, %s26, 1
      %p411 = scmp.lt.s32.totalorder %s408, 7
      %s412 = scalar_select %p411, %s408, 7
      %s413 = smul.addr %s412, 2
      %s414 = smul.addr %s410, 16
      %s415 = sadd.s32 %s413, %s414
      %s416 = smul.addr %s415, 8
      %s417 = scalar_lea.vmem %s0, %s416
      %p418 = pneg %p65
      %p419 = pneg %p62
      %s420 = smul.u32 8, %s27
      %p421 = scmp.lt.s32.totalorder %s26, 1
      %s422 = scalar_select %p421, %s26, 1
      %p423 = scmp.lt.s32.totalorder %s420, 7
      %s424 = scalar_select %p423, %s420, 7
      %s425 = smul.addr %s424, 2
      %s426 = smul.addr %s422, 16
      %s427 = sadd.s32 %s425, %s426
      %s428 = smul.addr %s427, 8
      %s429 = scalar_lea.vmem %s1, %s428
      %p430 = pneg %p93
      %p431 = pneg %p90
      %s432 = sadd.s32 %s27, 1
      %s433 = smul.u32 %s432, 8
      %p434 = scmp.lt.s32.totalorder %s433, 7
      %s435 = scalar_select %p434, %s433, 7
      %p436 = scmp.lt.s32.totalorder %s26, 1
      %s437 = scalar_select %p436, %s26, 1
      %p438 = scmp.lt.s32.totalorder %s435, 7
      %s439 = scalar_select %p438, %s435, 7
      %s440 = smul.addr %s439, 2
      %s441 = smul.addr %s437, 16
      %s442 = sadd.s32 %s440, %s441
      %s443 = smul.addr %s442, 8
      %s444 = scalar_lea.vmem %s2, %s443
      %p445 = pneg %p129
      %p446 = pneg %p126
      %p447 = pneg %p150
      %p448 = pneg %p147
      %p449 = pneg %p171
      %p450 = pneg %p168
      %p451 = pneg %p192
      %p452 = pneg %p189
      %p453 = pneg %p213
      %p454 = pneg %p210
      %p455 = pneg %p234
      %p456 = pneg %p231
      %p457 = pneg %p255
      %p458 = pneg %p252
      %p459 = pneg %p276
      %p460 = pneg %p273
      %p461 = pneg %p304
      %p462 = pneg %p301
      %s463 = smul.u32 8, %s27
      %p464 = scmp.lt.s32.totalorder %s26, 1
      %s465 = scalar_select %p464, %s26, 1
      %p466 = scmp.lt.s32.totalorder %s463, 7
      %s467 = scalar_select %p466, %s463, 7
      %s468 = smul.addr %s465, 8
      %s469 = sadd.s32 %s467, %s468
      %s470 = smul.addr %s469, 8
      %s471 = scalar_lea.vmem %s10, %s470
      %s472 = smul.u32 %s27, 8
      %s473 = ssub.s32 %s472, 1
      %p474 = scmp.gt.s32.totalorder %s473, 0
      %s475 = scalar_select %p474, %s473, 0
      %p476 = scmp.lt.s32.totalorder %s26, 1
      %s477 = scalar_select %p476, %s26, 1
      %p478 = scmp.lt.s32.totalorder %s475, 7
      %s479 = scalar_select %p478, %s475, 7
      %s480 = smul.addr %s479, 2
      %s481 = smul.addr %s477, 16
      %s482 = sadd.s32 %s480, %s481
      %s483 = smul.addr %s482, 8
      %s484 = scalar_lea.vmem %s0, %s483
      %s485 = smul.u32 %s27, 8
      %s486 = ssub.s32 %s485, 1
      %p487 = scmp.gt.s32.totalorder %s486, 0
      %s488 = scalar_select %p487, %s486, 0
      %s489 = smul.u32 8, %s27
      %p490 = scmp.lt.s32.totalorder %s26, 1
      %s491 = scalar_select %p490, %s26, 1
      %p492 = scmp.lt.s32.totalorder %s489, 7
      %s493 = scalar_select %p492, %s489, 7
      %s494 = smul.addr %s493, 2
      %s495 = smul.addr %s491, 16
      %s496 = sadd.s32 %s494, %s495
      %s497 = smul.addr %s496, 8
      %s498 = scalar_lea.vmem %s1, %s497
      %s499 = smul.u32 8, %s27
      %s500 = sadd.s32 %s27, 1
      %s501 = smul.u32 %s500, 8
      %p502 = scmp.lt.s32.totalorder %s501, 7
      %s503 = scalar_select %p502, %s501, 7
      %p504 = scmp.lt.s32.totalorder %s26, 1
      %s505 = scalar_select %p504, %s26, 1
      %p506 = scmp.lt.s32.totalorder %s503, 7
      %s507 = scalar_select %p506, %s503, 7
      %s508 = smul.addr %s507, 2
      %s509 = smul.addr %s505, 16
      %s510 = sadd.s32 %s508, %s509
      %s511 = smul.addr %s510, 8
      %s512 = scalar_lea.vmem %s2, %s511
      %s513 = sadd.s32 %s27, 1
      %s514 = smul.u32 %s513, 8
      %p515 = scmp.lt.s32.totalorder %s514, 7
      %s516 = scalar_select %p515, %s514, 7
      %s517 = smul.u32 8, %s27
      %p518 = scmp.lt.s32.totalorder %s26, 1
      %s519 = scalar_select %p518, %s26, 1
      %p520 = scmp.lt.s32.totalorder %s517, 7
      %s521 = scalar_select %p520, %s517, 7
      %s522 = smul.addr %s519, 8
      %s523 = sadd.s32 %s521, %s522
      %s524 = smul.addr %s523, 8
      %s525 = scalar_lea.vmem %s10, %s524
      %s526 = smul.u32 8, %s27
      %s528 = sld [smem:[#allocation3]]
      %v529 = vld [vmem:[%s484] sm:$0xff]
      %v530 = vld [vmem:[%s484 + $0x8] sm:$0xff]
      %v531 = vld [vmem:[%s498] sm:$0xff]
      %v532 = vld [vmem:[%s498 + $0x8] sm:$0xff]
      %v533 = vld [vmem:[%s498 + $0x10] sm:$0xff]
      %v534 = vld [vmem:[%s498 + $0x18] sm:$0xff]
      %v535 = vld [vmem:[%s498 + $0x20] sm:$0xff]
      %v536 = vld [vmem:[%s498 + $0x28] sm:$0xff]
      %v537 = vld [vmem:[%s498 + $0x30] sm:$0xff]
      %v538 = vld [vmem:[%s498 + $0x38] sm:$0xff]
      %v539 = vld [vmem:[%s498 + $0x40] sm:$0xff]
      %v540 = vld [vmem:[%s498 + $0x48] sm:$0xff]
      %v541 = vld [vmem:[%s498 + $0x50] sm:$0xff]
      %v542 = vld [vmem:[%s498 + $0x58] sm:$0xff]
      %v543 = vld [vmem:[%s498 + $0x60] sm:$0xff]
      %v544 = vld [vmem:[%s498 + $0x68] sm:$0xff]
      %v545 = vld [vmem:[%s498 + $0x70] sm:$0xff]
      %v546 = vld [vmem:[%s498 + $0x78] sm:$0xff]
      %v547 = vld [vmem:[%s512] sm:$0xff]
      %v548 = vld [vmem:[%s512 + $0x8] sm:$0xff]
      %v549 = vpack.c.bf16 %v530, %v529
      %v550 = vpack.c.bf16 %v532, %v531
      %v551 = vpack.c.bf16 %v534, %v533
      %v552 = vpack.c.bf16 %v536, %v535
      %v553 = vpack.c.bf16 %v538, %v537
      %v554 = vpack.c.bf16 %v540, %v539
      %v555 = vpack.c.bf16 %v542, %v541
      %v556 = vpack.c.bf16 %v544, %v543
      %v557 = vpack.c.bf16 %v546, %v545
      %v558 = vpack.c.bf16 %v548, %v547
      %v559 = vld [vmem:[%s3] sm:$0xf]
      %v560 = vld [vmem:[%s3 + $0x4] sm:$0xf]
      %v561 = vld [vmem:[%s4] sm:$0x1]
      %v562 = vlaneseq
      %v563 = vshrl.u32 %v562, 7
      %v564 = vsub.s32 0, %v563
      %v565 = vrot.slane %v561, %v564
      %v568 = vunpack.c.l.b16 %v559
      %v569 = vunpack.c.l.b16 %v560
      %v570 = vpack.c.b16 %v569, %v568
      %vm572 = vcmask 130048
      %v574 = vsel %vm572, %v549, 0
      %v577 = vsel %vm572, %v550, 0
      %v580 = vsel %vm572, %v551, 0
      %v583 = vsel %vm572, %v552, 0
      %v586 = vsel %vm572, %v553, 0
      %v589 = vsel %vm572, %v554, 0
      %v592 = vsel %vm572, %v555, 0
      %v595 = vsel %vm572, %v556, 0
      %v598 = vsel %vm572, %v557, 0
      %v601 = vsel %vm572, %v558, 0
      %603 = vmatprep.subr.bf16.mxu0 0
      %604 = vmatpush1.bf16.msra.mxu0 %v570
      %605 = vmatprep.subr.bf16.mxu0 0
      %606 = vmatpush1.bf16.msra.mxu0 0
      %607 = vmatprep.subr.bf16.mxu0 0
      %608 = vmatpush1.bf16.msra.mxu0 0
      %609 = vmatprep.subr.bf16.mxu0 0
      %610 = vmatpush1.bf16.msra.mxu0 0
      %611 = vmatprep.subr.bf16.mxu0 0
      %612 = vmatpush1.bf16.msra.mxu0 0
      %613 = vmatprep.subr.bf16.mxu0 0
      %614 = vmatpush1.bf16.msra.mxu0 0
      %615 = vmatprep.subr.bf16.mxu0 0
      %616 = vmatpush1.bf16.msra.mxu0 0
      %617 = vmatprep.subr.bf16.mxu0 0
      %618 = vmatpush1.bf16.msra.mxu0 0
      %619 = vmatprep.subr.bf16.mxu0 0
      %620 = vmatpush1.bf16.msra.mxu0 0
      %621 = vmatprep.subr.bf16.mxu0 0
      %622 = vmatpush1.bf16.msra.mxu0 0
      %623 = vmatprep.subr.bf16.mxu0 0
      %624 = vmatpush1.bf16.msra.mxu0 0
      %625 = vmatprep.subr.bf16.mxu0 0
      %626 = vmatpush1.bf16.msra.mxu0 0
      %627 = vmatprep.subr.bf16.mxu0 0
      %628 = vmatpush1.bf16.msra.mxu0 0
      %629 = vmatprep.subr.bf16.mxu0 0
      %630 = vmatpush1.bf16.msra.mxu0 0
      %631 = vmatprep.subr.bf16.mxu0 0
      %632 = vmatpush1.bf16.msra.mxu0 0
      %633 = vmatprep.subr.bf16.mxu0 0
      %634 = vmatpush1.bf16.msra.mxu0 0
      %635 = vmatprep.mubr.bf16.mxu0 0
      %636 = vmatmul.mubr.bf16.gmra.mrb[0].mxu0 %v574
      %v637 = vpop.f32.mrb[0].mxu0
      %v638 = vadd.f32 %v565, %v637
      %v639 = vpop.f32.mrb[0].mxu0
      %v640 = vpop.f32.mrb[0].mxu0
      %v641 = vadd.f32 %v565, %v640
      %v642 = vpop.f32.mrb[0].mxu0
      %643 = vmatprep.mubr.bf16.mxu0 0
      %644 = vmatmul.mubr.bf16.gmra.mrb[0].mxu0 %v577
      %v645 = vpop.f32.mrb[0].mxu0
      %v646 = vadd.f32 %v565, %v645
      %v647 = vpop.f32.mrb[0].mxu0
      %v648 = vpop.f32.mrb[0].mxu0
      %v649 = vadd.f32 %v565, %v648
      %v650 = vpop.f32.mrb[0].mxu0
      %651 = vmatprep.mubr.bf16.mxu0 0
      %652 = vmatmul.mubr.bf16.gmra.mrb[0].mxu0 %v580
      %v653 = vpop.f32.mrb[0].mxu0
      %v654 = vadd.f32 %v565, %v653
      %v655 = vpop.f32.mrb[0].mxu0
      %v656 = vpop.f32.mrb[0].mxu0
      %v657 = vadd.f32 %v565, %v656
      %v658 = vpop.f32.mrb[0].mxu0
      %659 = vmatprep.mubr.bf16.mxu0 0
      %660 = vmatmul.mubr.bf16.gmra.mrb[0].mxu0 %v583
      %v661 = vpop.f32.mrb[0].mxu0
      %v662 = vadd.f32 %v565, %v661
      %v663 = vpop.f32.mrb[0].mxu0
      %v664 = vpop.f32.mrb[0].mxu0
      %v665 = vadd.f32 %v565, %v664
      %v666 = vpop.f32.mrb[0].mxu0
      %667 = vmatprep.mubr.bf16.mxu0 0
      %668 = vmatmul.mubr.bf16.gmra.mrb[0].mxu0 %v586
      %v669 = vpop.f32.mrb[0].mxu0
      %v670 = vadd.f32 %v565, %v669
      %v671 = vpop.f32.mrb[0].mxu0
      %v672 = vpop.f32.mrb[0].mxu0
      %v673 = vadd.f32 %v565, %v672
      %v674 = vpop.f32.mrb[0].mxu0
      %675 = vmatprep.mubr.bf16.mxu0 0
      %676 = vmatmul.mubr.bf16.gmra.mrb[0].mxu0 %v589
      %v677 = vpop.f32.mrb[0].mxu0
      %v678 = vadd.f32 %v565, %v677
      %v679 = vpop.f32.mrb[0].mxu0
      %v680 = vpop.f32.mrb[0].mxu0
      %v681 = vadd.f32 %v565, %v680
      %v682 = vpop.f32.mrb[0].mxu0
      %683 = vmatprep.mubr.bf16.mxu0 0
      %684 = vmatmul.mubr.bf16.gmra.mrb[0].mxu0 %v592
      %v685 = vpop.f32.mrb[0].mxu0
      %v686 = vadd.f32 %v565, %v685
      %v687 = vpop.f32.mrb[0].mxu0
      %v688 = vpop.f32.mrb[0].mxu0
      %v689 = vadd.f32 %v565, %v688
      %v690 = vpop.f32.mrb[0].mxu0
      %691 = vmatprep.mubr.bf16.mxu0 0
      %692 = vmatmul.mubr.bf16.gmra.mrb[0].mxu0 %v595
      %v693 = vpop.f32.mrb[0].mxu0
      %v694 = vadd.f32 %v565, %v693
      %v695 = vpop.f32.mrb[0].mxu0
      %v696 = vpop.f32.mrb[0].mxu0
      %v697 = vadd.f32 %v565, %v696
      %v698 = vpop.f32.mrb[0].mxu0
      %699 = vmatprep.mubr.bf16.mxu0 0
      %700 = vmatmul.mubr.bf16.gmra.mrb[0].mxu0 %v598
      %v701 = vpop.f32.mrb[0].mxu0
      %v702 = vadd.f32 %v565, %v701
      %v703 = vpop.f32.mrb[0].mxu0
      %v704 = vpop.f32.mrb[0].mxu0
      %v705 = vadd.f32 %v565, %v704
      %v706 = vpop.f32.mrb[0].mxu0
      %707 = vmatprep.mubr.bf16.mxu0 0
      %708 = vmatmul.mubr.bf16.gmra.mrb[0].mxu0 %v601
      %v709 = vpop.f32.mrb[0].mxu0
      %v710 = vadd.f32 %v565, %v709
      %v711 = vpop.f32.mrb[0].mxu0
      %v712 = vpop.f32.mrb[0].mxu0
      %v713 = vadd.f32 %v565, %v712
      %v714 = vpop.f32.mrb[0].mxu0
      %715 = vdwg.mxu0
      %vm716 = vcmp.ge.f32.partialorder %v638, 0.0
      %vm717 = vcmp.ge.f32.partialorder %v641, 0.0
      %vm718 = vcmp.ge.f32.partialorder %v646, 0.0
      %vm719 = vcmp.ge.f32.partialorder %v649, 0.0
      %vm720 = vcmp.ge.f32.partialorder %v654, 0.0
      %vm721 = vcmp.ge.f32.partialorder %v657, 0.0
      %vm722 = vcmp.ge.f32.partialorder %v662, 0.0
      %vm723 = vcmp.ge.f32.partialorder %v665, 0.0
      %vm724 = vcmp.ge.f32.partialorder %v670, 0.0
      %vm725 = vcmp.ge.f32.partialorder %v673, 0.0
      %vm726 = vcmp.ge.f32.partialorder %v678, 0.0
      %vm727 = vcmp.ge.f32.partialorder %v681, 0.0
      %vm728 = vcmp.ge.f32.partialorder %v686, 0.0
      %vm729 = vcmp.ge.f32.partialorder %v689, 0.0
      %vm730 = vcmp.ge.f32.partialorder %v694, 0.0
      %vm731 = vcmp.ge.f32.partialorder %v697, 0.0
      %vm732 = vcmp.ge.f32.partialorder %v702, 0.0
      %vm733 = vcmp.ge.f32.partialorder %v705, 0.0
      %vm734 = vcmp.ge.f32.partialorder %v710, 0.0
      %vm735 = vcmp.ge.f32.partialorder %v713, 0.0
      %v736 = vstv %s528
      %v737 = vmul.f32 %v736, %v638
      %v738 = vmul.f32 %v736, %v641
      %v739 = vmul.f32 %v736, %v646
      %v740 = vmul.f32 %v736, %v649
      %v741 = vmul.f32 %v736, %v654
      %v742 = vmul.f32 %v736, %v657
      %v743 = vmul.f32 %v736, %v662
      %v744 = vmul.f32 %v736, %v665
      %v745 = vmul.f32 %v736, %v670
      %v746 = vmul.f32 %v736, %v673
      %v747 = vmul.f32 %v736, %v678
      %v748 = vmul.f32 %v736, %v681
      %v749 = vmul.f32 %v736, %v686
      %v750 = vmul.f32 %v736, %v689
      %v751 = vmul.f32 %v736, %v694
      %v752 = vmul.f32 %v736, %v697
      %v753 = vmul.f32 %v736, %v702
      %v754 = vmul.f32 %v736, %v705
      %v755 = vmul.f32 %v736, %v710
      %v756 = vmul.f32 %v736, %v713
      %v757 = vsel %vm716, %v638, %v737
      %v758 = vsel %vm717, %v641, %v738
      %v759 = vsel %vm718, %v646, %v739
      %v760 = vsel %vm719, %v649, %v740
      %v761 = vsel %vm720, %v654, %v741
      %v762 = vsel %vm721, %v657, %v742
      %v763 = vsel %vm722, %v662, %v743
      %v764 = vsel %vm723, %v665, %v744
      %v765 = vsel %vm724, %v670, %v745
      %v766 = vsel %vm725, %v673, %v746
      %v767 = vsel %vm726, %v678, %v747
      %v768 = vsel %vm727, %v681, %v748
      %v769 = vsel %vm728, %v686, %v749
      %v770 = vsel %vm729, %v689, %v750
      %v771 = vsel %vm730, %v694, %v751
      %v772 = vsel %vm731, %v697, %v752
      %v773 = vsel %vm732, %v702, %v753
      %v774 = vsel %vm733, %v705, %v754
      %v775 = vsel %vm734, %v710, %v755
      %v776 = vsel %vm735, %v713, %v756
      %v777 = vld [vmem:[%s4 + $0x1] sm:$0x1]
      %v778 = vlaneseq
      %v779 = vshrl.u32 %v778, 7
      %v780 = vsub.s32 0, %v779
      %v781 = vrot.slane %v777, %v780
      %v782 = vmul.f32 %v757, %v781
      %v783 = vmul.f32 %v758, %v781
      %v784 = vmul.f32 %v759, %v781
      %v785 = vmul.f32 %v760, %v781
      %v786 = vmul.f32 %v761, %v781
      %v787 = vmul.f32 %v762, %v781
      %v788 = vmul.f32 %v763, %v781
      %v789 = vmul.f32 %v764, %v781
      %v790 = vmul.f32 %v765, %v781
      %v791 = vmul.f32 %v766, %v781
      %v792 = vmul.f32 %v767, %v781
      %v793 = vmul.f32 %v768, %v781
      %v794 = vmul.f32 %v769, %v781
      %v795 = vmul.f32 %v770, %v781
      %v796 = vmul.f32 %v771, %v781
      %v797 = vmul.f32 %v772, %v781
      %v798 = vmul.f32 %v773, %v781
      %v799 = vmul.f32 %v774, %v781
      %v800 = vmul.f32 %v775, %v781
      %v801 = vmul.f32 %v776, %v781
      %v802 = vld [vmem:[%s4 + $0x2] sm:$0x1]
      %v803 = vlaneseq
      %v804 = vshrl.u32 %v803, 7
      %v805 = vsub.s32 0, %v804
      %v806 = vrot.slane %v802, %v805
      %v807 = vadd.f32 %v782, %v806
      %v808 = vadd.f32 %v783, %v806
      %v809 = vadd.f32 %v784, %v806
      %v810 = vadd.f32 %v785, %v806
      %v811 = vadd.f32 %v786, %v806
      %v812 = vadd.f32 %v787, %v806
      %v813 = vadd.f32 %v788, %v806
      %v814 = vadd.f32 %v789, %v806
      %v815 = vadd.f32 %v790, %v806
      %v816 = vadd.f32 %v791, %v806
      %v817 = vadd.f32 %v792, %v806
      %v818 = vadd.f32 %v793, %v806
      %v819 = vadd.f32 %v794, %v806
      %v820 = vadd.f32 %v795, %v806
      %v821 = vadd.f32 %v796, %v806
      %v822 = vadd.f32 %v797, %v806
      %v823 = vadd.f32 %v798, %v806
      %v824 = vadd.f32 %v799, %v806
      %v825 = vadd.f32 %v800, %v806
      %v826 = vadd.f32 %v801, %v806
      %s827 = smul.u32 %s27, 8
      %s828 = ssub.s32 %s827, 1
      %v829 = vstv %s828
      %v830 = vadd.s32 %v829, 1
      %v831 = vadd.s32 %v829, 2
      %v832 = vadd.s32 %v829, 3
      %v833 = vadd.s32 %v829, 4
      %v834 = vadd.s32 %v829, 5
      %v835 = vadd.s32 %v829, 6
      %v836 = vadd.s32 %v829, 7
      %v837 = vadd.s32 %v829, 8
      %v838 = vadd.s32 %v829, 9
      %v839 = vlaneseq
      %v840 = vshrl.u32 %v839, 7
      %v841 = vadd.s32 %v840, 8
      %vm842 = vcmp.ge.s32.totalorder %v829, 0
      %vm843 = vcmp.ge.s32.totalorder %v830, 0
      %vm844 = vcmp.ge.s32.totalorder %v831, 0
      %vm845 = vcmp.ge.s32.totalorder %v832, 0
      %vm846 = vcmp.ge.s32.totalorder %v833, 0
      %vm847 = vcmp.ge.s32.totalorder %v834, 0
      %vm848 = vcmp.ge.s32.totalorder %v835, 0
      %vm849 = vcmp.ge.s32.totalorder %v836, 0
      %vm850 = vcmp.ge.s32.totalorder %v837, 0
      %vm851 = vcmp.ge.s32.totalorder %v838, 0
      %vm852 = vcmp.lt.s32.totalorder %v829, 8
      %vm853 = vcmp.lt.s32.totalorder %v830, 8
      %vm854 = vcmp.lt.s32.totalorder %v831, 8
      %vm855 = vcmp.lt.s32.totalorder %v832, 8
      %vm856 = vcmp.lt.s32.totalorder %v833, 8
      %vm857 = vcmp.lt.s32.totalorder %v834, 8
      %vm858 = vcmp.lt.s32.totalorder %v835, 8
      %vm859 = vcmp.lt.s32.totalorder %v836, 8
      %vm860 = vcmp.lt.s32.totalorder %v837, 8
      %vm861 = vcmp.lt.s32.totalorder %v838, 8
      %vm862 = vmand %vm842, %vm852
      %vm863 = vmand %vm843, %vm853
      %vm864 = vmand %vm844, %vm854
      %vm865 = vmand %vm845, %vm855
      %vm866 = vmand %vm846, %vm856
      %vm867 = vmand %vm847, %vm857
      %vm868 = vmand %vm848, %vm858
      %vm869 = vmand %vm849, %vm859
      %vm870 = vmand %vm850, %vm860
      %vm871 = vmand %vm851, %vm861
      %vm872 = vcmp.ge.s32.totalorder %v840, 1
      %vm873 = vcmp.ge.s32.totalorder %v841, 1
      %v874 = vsel %vm862, 1, 0
      %v875 = vsel %vm863, 1, 0
      %v876 = vsel %vm864, 1, 0
      %v877 = vsel %vm865, 1, 0
      %v878 = vsel %vm866, 1, 0
      %v879 = vsel %vm867, 1, 0
      %v880 = vsel %vm868, 1, 0
      %v881 = vsel %vm869, 1, 0
      %v882 = vsel %vm870, 1, 0
      %v883 = vsel %vm871, 1, 0
      %vm884 = vcmp.eq.s32.totalorder %v874, 1
      %vm885 = vcmp.eq.s32.totalorder %v875, 1
      %vm886 = vcmp.eq.s32.totalorder %v876, 1
      %vm887 = vcmp.eq.s32.totalorder %v877, 1
      %vm888 = vcmp.eq.s32.totalorder %v878, 1
      %vm889 = vcmp.eq.s32.totalorder %v879, 1
      %vm890 = vcmp.eq.s32.totalorder %v880, 1
      %vm891 = vcmp.eq.s32.totalorder %v881, 1
      %vm892 = vcmp.eq.s32.totalorder %v882, 1
      %vm893 = vcmp.eq.s32.totalorder %v883, 1
      %v894 = vsel %vm872, 1, 0
      %v895 = vsel %vm873, 1, 0
      %vm896 = vcmp.eq.s32.totalorder %v894, 1
      %vm897 = vcmp.eq.s32.totalorder %v895, 1
      %vm898 = vmand %vm884, %vm896
      %vm899 = vmand %vm884, %vm897
      %vm900 = vmand %vm885, %vm896
      %vm901 = vmand %vm885, %vm897
      %vm902 = vmand %vm886, %vm896
      %vm903 = vmand %vm886, %vm897
      %vm904 = vmand %vm887, %vm896
      %vm905 = vmand %vm887, %vm897
      %vm906 = vmand %vm888, %vm896
      %vm907 = vmand %vm888, %vm897
      %vm908 = vmand %vm889, %vm896
      %vm909 = vmand %vm889, %vm897
      %vm910 = vmand %vm890, %vm896
      %vm911 = vmand %vm890, %vm897
      %vm912 = vmand %vm891, %vm896
      %vm913 = vmand %vm891, %vm897
      %vm914 = vmand %vm892, %vm896
      %vm915 = vmand %vm892, %vm897
      %vm916 = vmand %vm893, %vm896
      %vm917 = vmand %vm893, %vm897
      %vm918 = vcmp.le.s32.totalorder %v840, 8
      %vm919 = vcmp.le.s32.totalorder %v841, 8
      %v920 = vsel %vm918, 1, 0
      %v921 = vsel %vm919, 1, 0
      %vm922 = vcmp.eq.s32.totalorder %v920, 1
      %vm923 = vcmp.eq.s32.totalorder %v921, 1
      %vm924 = vmand %vm898, %vm922
      %vm925 = vmand %vm899, %vm923
      %vm926 = vmand %vm900, %vm922
      %vm927 = vmand %vm901, %vm923
      %vm928 = vmand %vm902, %vm922
      %vm929 = vmand %vm903, %vm923
      %vm930 = vmand %vm904, %vm922
      %vm931 = vmand %vm905, %vm923
      %vm932 = vmand %vm906, %vm922
      %vm933 = vmand %vm907, %vm923
      %vm934 = vmand %vm908, %vm922
      %vm935 = vmand %vm909, %vm923
      %vm936 = vmand %vm910, %vm922
      %vm937 = vmand %vm911, %vm923
      %vm938 = vmand %vm912, %vm922
      %vm939 = vmand %vm913, %vm923
      %vm940 = vmand %vm914, %vm922
      %vm941 = vmand %vm915, %vm923
      %vm942 = vmand %vm916, %vm922
      %vm943 = vmand %vm917, %vm923
      %v944 = vsel %vm924, 1, 0
      %v945 = vsel %vm925, 1, 0
      %v946 = vsel %vm926, 1, 0
      %v947 = vsel %vm927, 1, 0
      %v948 = vsel %vm928, 1, 0
      %v949 = vsel %vm929, 1, 0
      %v950 = vsel %vm930, 1, 0
      %v951 = vsel %vm931, 1, 0
      %v952 = vsel %vm932, 1, 0
      %v953 = vsel %vm933, 1, 0
      %v954 = vsel %vm934, 1, 0
      %v955 = vsel %vm935, 1, 0
      %v956 = vsel %vm936, 1, 0
      %v957 = vsel %vm937, 1, 0
      %v958 = vsel %vm938, 1, 0
      %v959 = vsel %vm939, 1, 0
      %v960 = vsel %vm940, 1, 0
      %v961 = vsel %vm941, 1, 0
      %v962 = vsel %vm942, 1, 0
      %v963 = vsel %vm943, 1, 0
      %vm964 = vcmp.eq.s32.totalorder %v944, 1
      %vm965 = vcmp.eq.s32.totalorder %v945, 1
      %vm966 = vcmp.eq.s32.totalorder %v946, 1
      %vm967 = vcmp.eq.s32.totalorder %v947, 1
      %vm968 = vcmp.eq.s32.totalorder %v948, 1
      %vm969 = vcmp.eq.s32.totalorder %v949, 1
      %vm970 = vcmp.eq.s32.totalorder %v950, 1
      %vm971 = vcmp.eq.s32.totalorder %v951, 1
      %vm972 = vcmp.eq.s32.totalorder %v952, 1
      %vm973 = vcmp.eq.s32.totalorder %v953, 1
      %vm974 = vcmp.eq.s32.totalorder %v954, 1
      %vm975 = vcmp.eq.s32.totalorder %v955, 1
      %vm976 = vcmp.eq.s32.totalorder %v956, 1
      %vm977 = vcmp.eq.s32.totalorder %v957, 1
      %vm978 = vcmp.eq.s32.totalorder %v958, 1
      %vm979 = vcmp.eq.s32.totalorder %v959, 1
      %vm980 = vcmp.eq.s32.totalorder %v960, 1
      %vm981 = vcmp.eq.s32.totalorder %v961, 1
      %vm982 = vcmp.eq.s32.totalorder %v962, 1
      %vm983 = vcmp.eq.s32.totalorder %v963, 1
      %v984 = vsel %vm964, %v807, 0.0
      %v985 = vsel %vm965, %v808, 0.0
      %v986 = vsel %vm966, %v809, 0.0
      %v987 = vsel %vm967, %v810, 0.0
      %v988 = vsel %vm968, %v811, 0.0
      %v989 = vsel %vm969, %v812, 0.0
      %v990 = vsel %vm970, %v813, 0.0
      %v991 = vsel %vm971, %v814, 0.0
      %v992 = vsel %vm972, %v815, 0.0
      %v993 = vsel %vm973, %v816, 0.0
      %v994 = vsel %vm974, %v817, 0.0
      %v995 = vsel %vm975, %v818, 0.0
      %v996 = vsel %vm976, %v819, 0.0
      %v997 = vsel %vm977, %v820, 0.0
      %v998 = vsel %vm978, %v821, 0.0
      %v999 = vsel %vm979, %v822, 0.0
      %v1000 = vsel %vm980, %v823, 0.0
      %v1001 = vsel %vm981, %v824, 0.0
      %v1002 = vsel %vm982, %v825, 0.0
      %v1003 = vsel %vm983, %v826, 0.0
      %v1004 = vpack.c.bf16 %v984, %v984
      %v1005 = vpack.c.bf16 %v986, %v986
      %v1006 = vpack.c.bf16 %v988, %v988
      %v1007 = vpack.c.bf16 %v990, %v990
      %v1008 = vpack.c.bf16 %v992, %v992
      %v1009 = vpack.c.bf16 %v994, %v994
      %v1010 = vpack.c.bf16 %v996, %v996
      %v1011 = vpack.c.bf16 %v998, %v998
      %v1012 = vpack.c.bf16 %v1000, %v1000
      %v1013 = vpack.c.bf16 %v1002, %v1002
      %1014 = vst [vmem:[#allocation2] sm:$0xf] %v1004
      %1015 = vst [vmem:[#allocation2 + $0xc] sm:$0xf] %v1005
      %1016 = vst [vmem:[#allocation2 + $0x18] sm:$0xf] %v1006
      %1017 = vst [vmem:[#allocation2 + $0x24] sm:$0xf] %v1007
      %1018 = vst [vmem:[#allocation2 + $0x30] sm:$0xf] %v1008
      %1019 = vst [vmem:[#allocation2 + $0x3c] sm:$0xf] %v1009
      %1020 = vst [vmem:[#allocation2 + $0x48] sm:$0xf] %v1010
      %1021 = vst [vmem:[#allocation2 + $0x54] sm:$0xf] %v1011
      %1022 = vst [vmem:[#allocation2 + $0x60] sm:$0xf] %v1012
      %1023 = vst [vmem:[#allocation2 + $0x6c] sm:$0xf] %v1013
      %v1024 = vpack.c.bf16 %v985, %v984
      %v1025 = vpack.c.bf16 %v987, %v986
      %v1026 = vpack.c.bf16 %v989, %v988
      %v1027 = vpack.c.bf16 %v991, %v990
      %v1028 = vpack.c.bf16 %v993, %v992
      %v1029 = vpack.c.bf16 %v995, %v994
      %v1030 = vpack.c.bf16 %v997, %v996
      %v1031 = vpack.c.bf16 %v999, %v998
      %v1032 = vpack.c.bf16 %v1001, %v1000
      %v1033 = vpack.c.bf16 %v1003, %v1002
      %v1044 = vunpack.c.l.b16 %v1024
      %v1045 = vunpack.c.h.b16 %v1024
      %v1046 = vunpack.c.l.b16 %v1025
      %v1047 = vunpack.c.h.b16 %v1025
      %v1048 = vunpack.c.l.b16 %v1026
      %v1049 = vunpack.c.h.b16 %v1026
      %v1050 = vunpack.c.l.b16 %v1027
      %v1051 = vunpack.c.h.b16 %v1027
      %v1052 = vunpack.c.l.b16 %v1028
      %v1053 = vunpack.c.h.b16 %v1028
      %v1054 = vunpack.c.l.b16 %v1029
      %v1055 = vunpack.c.h.b16 %v1029
      %v1056 = vunpack.c.l.b16 %v1030
      %v1057 = vunpack.c.h.b16 %v1030
      %v1058 = vunpack.c.l.b16 %v1031
      %v1059 = vunpack.c.h.b16 %v1031
      %v1060 = vunpack.c.l.b16 %v1032
      %v1061 = vunpack.c.h.b16 %v1032
      %v1062 = vunpack.c.l.b16 %v1033
      %v1063 = vunpack.c.h.b16 %v1033
      %v1064 = vpack.c.b16 %v1044, %v1044
      %v1065 = vpack.c.b16 %v1045, %v1045
      %v1066 = vpack.c.b16 %v1046, %v1046
      %v1067 = vpack.c.b16 %v1047, %v1047
      %v1068 = vpack.c.b16 %v1048, %v1048
      %v1069 = vpack.c.b16 %v1049, %v1049
      %v1070 = vpack.c.b16 %v1050, %v1050
      %v1071 = vpack.c.b16 %v1051, %v1051
      %v1072 = vpack.c.b16 %v1052, %v1052
      %v1073 = vpack.c.b16 %v1053, %v1053
      %v1074 = vpack.c.b16 %v1054, %v1054
      %v1075 = vpack.c.b16 %v1055, %v1055
      %v1076 = vpack.c.b16 %v1056, %v1056
      %v1077 = vpack.c.b16 %v1057, %v1057
      %v1078 = vpack.c.b16 %v1058, %v1058
      %v1079 = vpack.c.b16 %v1059, %v1059
      %v1080 = vpack.c.b16 %v1060, %v1060
      %v1081 = vpack.c.b16 %v1061, %v1061
      %v1082 = vpack.c.b16 %v1062, %v1062
      %v1083 = vpack.c.b16 %v1063, %v1063
      %vm1084 = vsmask.f32 3328
      %vm1085 = vsmask.f32 7440
      %vm1086 = vmor %vm1084, %vm1085
      %v1088 = vshrl.u32 %v1064, 16
      %v1090 = vrot.slane %v1088, 4
      %v1091 = vshll.u32 %v1064, 16
      %v1093 = vrot.slane %v1091, 5
      %v1094 = vor.u32 %v1090, %v1093
      %v1095 = vrot.slane %v1094, 4
      %v1097 = vshll.u32 %v1065, 16
      %v1099 = vrot.slane %v1097, 5
      %v1100 = vsel %vm1086, %v1095, %v1099
      %v1102 = vshrl.u32 %v1066, 16
      %v1104 = vrot.slane %v1102, 4
      %v1105 = vshll.u32 %v1066, 16
      %v1107 = vrot.slane %v1105, 5
      %v1108 = vor.u32 %v1104, %v1107
      %v1109 = vrot.slane %v1108, 4
      %v1111 = vshll.u32 %v1067, 16
      %v1113 = vrot.slane %v1111, 5
      %v1114 = vsel %vm1086, %v1109, %v1113
      %v1116 = vshrl.u32 %v1068, 16
      %v1118 = vrot.slane %v1116, 4
      %v1119 = vshll.u32 %v1068, 16
      %v1121 = vrot.slane %v1119, 5
      %v1122 = vor.u32 %v1118, %v1121
      %v1123 = vrot.slane %v1122, 4
      %v1125 = vshll.u32 %v1069, 16
      %v1127 = vrot.slane %v1125, 5
      %v1128 = vsel %vm1086, %v1123, %v1127
      %v1130 = vshrl.u32 %v1070, 16
      %v1132 = vrot.slane %v1130, 4
      %v1133 = vshll.u32 %v1070, 16
      %v1135 = vrot.slane %v1133, 5
      %v1136 = vor.u32 %v1132, %v1135
      %v1137 = vrot.slane %v1136, 4
      %v1139 = vshll.u32 %v1071, 16
      %v1141 = vrot.slane %v1139, 5
      %v1142 = vsel %vm1086, %v1137, %v1141
      %v1144 = vshrl.u32 %v1072, 16
      %v1146 = vrot.slane %v1144, 4
      %v1147 = vshll.u32 %v1072, 16
      %v1149 = vrot.slane %v1147, 5
      %v1150 = vor.u32 %v1146, %v1149
      %v1151 = vrot.slane %v1150, 4
      %v1153 = vshll.u32 %v1073, 16
      %v1155 = vrot.slane %v1153, 5
      %v1156 = vsel %vm1086, %v1151, %v1155
      %v1158 = vshrl.u32 %v1074, 16
      %v1160 = vrot.slane %v1158, 4
      %v1161 = vshll.u32 %v1074, 16
      %v1163 = vrot.slane %v1161, 5
      %v1164 = vor.u32 %v1160, %v1163
      %v1165 = vrot.slane %v1164, 4
      %v1167 = vshll.u32 %v1075, 16
      %v1169 = vrot.slane %v1167, 5
      %v1170 = vsel %vm1086, %v1165, %v1169
      %v1172 = vshrl.u32 %v1076, 16
      %v1174 = vrot.slane %v1172, 4
      %v1175 = vshll.u32 %v1076, 16
      %v1177 = vrot.slane %v1175, 5
      %v1178 = vor.u32 %v1174, %v1177
      %v1179 = vrot.slane %v1178, 4
      %v1181 = vshll.u32 %v1077, 16
      %v1183 = vrot.slane %v1181, 5
      %v1184 = vsel %vm1086, %v1179, %v1183
      %v1186 = vshrl.u32 %v1078, 16
      %v1188 = vrot.slane %v1186, 4
      %v1189 = vshll.u32 %v1078, 16
      %v1191 = vrot.slane %v1189, 5
      %v1192 = vor.u32 %v1188, %v1191
      %v1193 = vrot.slane %v1192, 4
      %v1195 = vshll.u32 %v1079, 16
      %v1197 = vrot.slane %v1195, 5
      %v1198 = vsel %vm1086, %v1193, %v1197
      %v1200 = vshrl.u32 %v1080, 16
      %v1202 = vrot.slane %v1200, 4
      %v1203 = vshll.u32 %v1080, 16
      %v1205 = vrot.slane %v1203, 5
      %v1206 = vor.u32 %v1202, %v1205
      %v1207 = vrot.slane %v1206, 4
      %v1209 = vshll.u32 %v1081, 16
      %v1211 = vrot.slane %v1209, 5
      %v1212 = vsel %vm1086, %v1207, %v1211
      %v1214 = vshrl.u32 %v1082, 16
      %v1216 = vrot.slane %v1214, 4
      %v1217 = vshll.u32 %v1082, 16
      %v1219 = vrot.slane %v1217, 5
      %v1220 = vor.u32 %v1216, %v1219
      %v1221 = vrot.slane %v1220, 4
      %v1223 = vshll.u32 %v1083, 16
      %v1225 = vrot.slane %v1223, 5
      %v1226 = vsel %vm1086, %v1221, %v1225
      %1237 = vst [vmem:[#allocation2 + $0x4] sm:$0xf] %v1100
      %1238 = vst [vmem:[#allocation2 + $0x10] sm:$0xf] %v1114
      %1239 = vst [vmem:[#allocation2 + $0x1c] sm:$0xf] %v1128
      %1240 = vst [vmem:[#allocation2 + $0x28] sm:$0xf] %v1142
      %1241 = vst [vmem:[#allocation2 + $0x34] sm:$0xf] %v1156
      %1242 = vst [vmem:[#allocation2 + $0x40] sm:$0xf] %v1170
      %1243 = vst [vmem:[#allocation2 + $0x4c] sm:$0xf] %v1184
      %1244 = vst [vmem:[#allocation2 + $0x58] sm:$0xf] %v1198
      %1245 = vst [vmem:[#allocation2 + $0x64] sm:$0xf] %v1212
      %1246 = vst [vmem:[#allocation2 + $0x70] sm:$0xf] %v1226
      %vm1247 = vcmask 1042432
      %vm1248 = vcmask 1046532
      %vm1249 = vmor %vm1247, %vm1248
      %v1250 = vrot.slane %v1064, 5
      %v1251 = vrot.slane %v1250, 4
      %v1252 = vrot.slane %v1065, 5
      %v1253 = vsel %vm1249, %v1251, %v1252
      %v1254 = vrot.slane %v1066, 5
      %v1255 = vrot.slane %v1254, 4
      %v1256 = vrot.slane %v1067, 5
      %v1257 = vsel %vm1249, %v1255, %v1256
      %v1258 = vrot.slane %v1068, 5
      %v1259 = vrot.slane %v1258, 4
      %v1260 = vrot.slane %v1069, 5
      %v1261 = vsel %vm1249, %v1259, %v1260
      %v1262 = vrot.slane %v1070, 5
      %v1263 = vrot.slane %v1262, 4
      %v1264 = vrot.slane %v1071, 5
      %v1265 = vsel %vm1249, %v1263, %v1264
      %v1266 = vrot.slane %v1072, 5
      %v1267 = vrot.slane %v1266, 4
      %v1268 = vrot.slane %v1073, 5
      %v1269 = vsel %vm1249, %v1267, %v1268
      %v1270 = vrot.slane %v1074, 5
      %v1271 = vrot.slane %v1270, 4
      %v1272 = vrot.slane %v1075, 5
      %v1273 = vsel %vm1249, %v1271, %v1272
      %v1274 = vrot.slane %v1076, 5
      %v1275 = vrot.slane %v1274, 4
      %v1276 = vrot.slane %v1077, 5
      %v1277 = vsel %vm1249, %v1275, %v1276
      %v1278 = vrot.slane %v1078, 5
      %v1279 = vrot.slane %v1278, 4
      %v1280 = vrot.slane %v1079, 5
      %v1281 = vsel %vm1249, %v1279, %v1280
      %v1282 = vrot.slane %v1080, 5
      %v1283 = vrot.slane %v1282, 4
      %v1284 = vrot.slane %v1081, 5
      %v1285 = vsel %vm1249, %v1283, %v1284
      %v1286 = vrot.slane %v1082, 5
      %v1287 = vrot.slane %v1286, 4
      %v1288 = vrot.slane %v1083, 5
      %v1289 = vsel %vm1249, %v1287, %v1288
      %1300 = vst [vmem:[#allocation2 + $0x8] sm:$0xf] %v1253
      %1301 = vst [vmem:[#allocation2 + $0x14] sm:$0xf] %v1257
      %1302 = vst [vmem:[#allocation2 + $0x20] sm:$0xf] %v1261
      %1303 = vst [vmem:[#allocation2 + $0x2c] sm:$0xf] %v1265
      %1304 = vst [vmem:[#allocation2 + $0x38] sm:$0xf] %v1269
      %1305 = vst [vmem:[#allocation2 + $0x44] sm:$0xf] %v1273
      %1306 = vst [vmem:[#allocation2 + $0x50] sm:$0xf] %v1277
      %1307 = vst [vmem:[#allocation2 + $0x5c] sm:$0xf] %v1281
      %1308 = vst [vmem:[#allocation2 + $0x68] sm:$0xf] %v1285
      %1309 = vst [vmem:[#allocation2 + $0x74] sm:$0xf] %v1289
      %v1310 = vld [vmem:[#allocation2] sm:$0xff]
      %v1311 = vld [vmem:[#allocation2 + $0x8] sm:$0xf]
      %v1312 = vld [vmem:[#allocation2 + $0xc] sm:$0xff]
      %v1313 = vld [vmem:[#allocation2 + $0x14] sm:$0xf]
      %v1314 = vld [vmem:[#allocation2 + $0x18] sm:$0xff]
      %v1315 = vld [vmem:[#allocation2 + $0x20] sm:$0xf]
      %v1316 = vld [vmem:[#allocation2 + $0x24] sm:$0xff]
      %v1317 = vld [vmem:[#allocation2 + $0x2c] sm:$0xf]
      %v1318 = vld [vmem:[#allocation2 + $0x30] sm:$0xff]
      %v1319 = vld [vmem:[#allocation2 + $0x38] sm:$0xf]
      %v1320 = vld [vmem:[#allocation2 + $0x3c] sm:$0xff]
      %v1321 = vld [vmem:[#allocation2 + $0x44] sm:$0xf]
      %v1322 = vld [vmem:[#allocation2 + $0x48] sm:$0xff]
      %v1323 = vld [vmem:[#allocation2 + $0x50] sm:$0xf]
      %v1324 = vld [vmem:[#allocation2 + $0x54] sm:$0xff]
      %v1325 = vld [vmem:[#allocation2 + $0x5c] sm:$0xf]
      %v1326 = vld [vmem:[%s5] sm:$0xf]
      %v1327 = vld [vmem:[%s5 + $0x4] sm:$0xf]
      %v1328 = vld [vmem:[%s5 + $0x8] sm:$0xf]
      %v1329 = vld [vmem:[%s5 + $0xc] sm:$0xf]
      %v1330 = vld [vmem:[%s5 + $0x10] sm:$0xf]
      %v1331 = vld [vmem:[%s5 + $0x14] sm:$0xf]
      %v1332 = vld [vmem:[%s5 + $0x18] sm:$0xf]
      %v1333 = vld [vmem:[%s5 + $0x1c] sm:$0xf]
      %v1334 = vld [vmem:[%s5 + $0x20] sm:$0xf]
      %v1335 = vld [vmem:[%s5 + $0x24] sm:$0xf]
      %v1336 = vld [vmem:[%s5 + $0x28] sm:$0xf]
      %v1337 = vld [vmem:[%s5 + $0x2c] sm:$0xf]
      %v1338 = vld [vmem:[%s5 + $0x30] sm:$0xf]
      %v1339 = vld [vmem:[%s5 + $0x34] sm:$0xf]
      %v1340 = vld [vmem:[%s5 + $0x38] sm:$0xf]
      %v1341 = vld [vmem:[%s5 + $0x3c] sm:$0xf]
      %v1342 = vld [vmem:[%s5 + $0x40] sm:$0xf]
      %v1343 = vld [vmem:[%s5 + $0x44] sm:$0xf]
      %v1344 = vld [vmem:[%s5 + $0x48] sm:$0xf]
      %v1345 = vld [vmem:[%s5 + $0x4c] sm:$0xf]
      %v1346 = vld [vmem:[%s5 + $0x50] sm:$0xf]
      %v1347 = vld [vmem:[%s5 + $0x54] sm:$0xf]
      %v1348 = vld [vmem:[%s5 + $0x58] sm:$0xf]
      %v1349 = vld [vmem:[%s5 + $0x5c] sm:$0xf]
      %v1350 = vld [vmem:[%s5 + $0x60] sm:$0xf]
      %v1351 = vld [vmem:[%s5 + $0x64] sm:$0xf]
      %v1352 = vld [vmem:[%s5 + $0x68] sm:$0xf]
      %v1353 = vld [vmem:[%s5 + $0x6c] sm:$0xf]
      %v1354 = vld [vmem:[%s5 + $0x70] sm:$0xf]
      %v1355 = vld [vmem:[%s5 + $0x74] sm:$0xf]
      %v1356 = vld [vmem:[%s5 + $0x78] sm:$0xf]
      %v1357 = vld [vmem:[%s5 + $0x7c] sm:$0xf]
      %v1358 = vld [vmem:[%s5 + $0x80] sm:$0xf]
      %v1359 = vld [vmem:[%s5 + $0x84] sm:$0xf]
      %v1360 = vld [vmem:[%s5 + $0x88] sm:$0xf]
      %v1361 = vld [vmem:[%s5 + $0x8c] sm:$0xf]
      %v1362 = vld [vmem:[%s5 + $0x90] sm:$0xf]
      %v1363 = vld [vmem:[%s5 + $0x94] sm:$0xf]
      %v1364 = vld [vmem:[%s5 + $0x98] sm:$0xf]
      %v1365 = vld [vmem:[%s5 + $0x9c] sm:$0xf]
      %v1366 = vld [vmem:[%s5 + $0xa0] sm:$0xf]
      %v1367 = vld [vmem:[%s5 + $0xa4] sm:$0xf]
      %v1368 = vld [vmem:[%s5 + $0xa8] sm:$0xf]
      %v1369 = vld [vmem:[%s5 + $0xac] sm:$0xf]
      %v1370 = vld [vmem:[%s5 + $0xb0] sm:$0xf]
      %v1371 = vld [vmem:[%s5 + $0xb4] sm:$0xf]
      %v1372 = vld [vmem:[%s5 + $0xb8] sm:$0xf]
      %v1373 = vld [vmem:[%s5 + $0xbc] sm:$0xf]
      %s1374 = scalar_lea.vmem [#allocation2], 12
      %v1375 = vld [vmem:[%s1374] sm:$0xff]
      %v1376 = vld [vmem:[%s1374 + $0x8] sm:$0xf]
      %v1377 = vld [vmem:[%s1374 + $0xc] sm:$0xff]
      %v1378 = vld [vmem:[%s1374 + $0x14] sm:$0xf]
      %v1379 = vld [vmem:[%s1374 + $0x18] sm:$0xff]
      %v1380 = vld [vmem:[%s1374 + $0x20] sm:$0xf]
      %v1381 = vld [vmem:[%s1374 + $0x24] sm:$0xff]
      %v1382 = vld [vmem:[%s1374 + $0x2c] sm:$0xf]
      %v1383 = vld [vmem:[%s1374 + $0x30] sm:$0xff]
      %v1384 = vld [vmem:[%s1374 + $0x38] sm:$0xf]
      %v1385 = vld [vmem:[%s1374 + $0x3c] sm:$0xff]
      %v1386 = vld [vmem:[%s1374 + $0x44] sm:$0xf]
      %v1387 = vld [vmem:[%s1374 + $0x48] sm:$0xff]
      %v1388 = vld [vmem:[%s1374 + $0x50] sm:$0xf]
      %v1389 = vld [vmem:[%s1374 + $0x54] sm:$0xff]
      %v1390 = vld [vmem:[%s1374 + $0x5c] sm:$0xf]
      %s1391 = scalar_lea.vmem %s5, 192
      %v1392 = vld [vmem:[%s1391] sm:$0xf]
      %v1393 = vld [vmem:[%s1391 + $0x4] sm:$0xf]
      %v1394 = vld [vmem:[%s1391 + $0x8] sm:$0xf]
      %v1395 = vld [vmem:[%s1391 + $0xc] sm:$0xf]
      %v1396 = vld [vmem:[%s1391 + $0x10] sm:$0xf]
      %v1397 = vld [vmem:[%s1391 + $0x14] sm:$0xf]
      %v1398 = vld [vmem:[%s1391 + $0x18] sm:$0xf]
      %v1399 = vld [vmem:[%s1391 + $0x1c] sm:$0xf]
      %v1400 = vld [vmem:[%s1391 + $0x20] sm:$0xf]
      %v1401 = vld [vmem:[%s1391 + $0x24] sm:$0xf]
      %v1402 = vld [vmem:[%s1391 + $0x28] sm:$0xf]
      %v1403 = vld [vmem:[%s1391 + $0x2c] sm:$0xf]
      %v1404 = vld [vmem:[%s1391 + $0x30] sm:$0xf]
      %v1405 = vld [vmem:[%s1391 + $0x34] sm:$0xf]
      %v1406 = vld [vmem:[%s1391 + $0x38] sm:$0xf]
      %v1407 = vld [vmem:[%s1391 + $0x3c] sm:$0xf]
      %v1408 = vld [vmem:[%s1391 + $0x40] sm:$0xf]
      %v1409 = vld [vmem:[%s1391 + $0x44] sm:$0xf]
      %v1410 = vld [vmem:[%s1391 + $0x48] sm:$0xf]
      %v1411 = vld [vmem:[%s1391 + $0x4c] sm:$0xf]
      %v1412 = vld [vmem:[%s1391 + $0x50] sm:$0xf]
      %v1413 = vld [vmem:[%s1391 + $0x54] sm:$0xf]
      %v1414 = vld [vmem:[%s1391 + $0x58] sm:$0xf]
      %v1415 = vld [vmem:[%s1391 + $0x5c] sm:$0xf]
      %v1416 = vld [vmem:[%s1391 + $0x60] sm:$0xf]
      %v1417 = vld [vmem:[%s1391 + $0x64] sm:$0xf]
      %v1418 = vld [vmem:[%s1391 + $0x68] sm:$0xf]
      %v1419 = vld [vmem:[%s1391 + $0x6c] sm:$0xf]
      %v1420 = vld [vmem:[%s1391 + $0x70] sm:$0xf]
      %v1421 = vld [vmem:[%s1391 + $0x74] sm:$0xf]
      %v1422 = vld [vmem:[%s1391 + $0x78] sm:$0xf]
      %v1423 = vld [vmem:[%s1391 + $0x7c] sm:$0xf]
      %v1424 = vld [vmem:[%s1391 + $0x80] sm:$0xf]
      %v1425 = vld [vmem:[%s1391 + $0x84] sm:$0xf]
      %v1426 = vld [vmem:[%s1391 + $0x88] sm:$0xf]
      %v1427 = vld [vmem:[%s1391 + $0x8c] sm:$0xf]
      %v1428 = vld [vmem:[%s1391 + $0x90] sm:$0xf]
      %v1429 = vld [vmem:[%s1391 + $0x94] sm:$0xf]
      %v1430 = vld [vmem:[%s1391 + $0x98] sm:$0xf]
      %v1431 = vld [vmem:[%s1391 + $0x9c] sm:$0xf]
      %v1432 = vld [vmem:[%s1391 + $0xa0] sm:$0xf]
      %v1433 = vld [vmem:[%s1391 + $0xa4] sm:$0xf]
      %v1434 = vld [vmem:[%s1391 + $0xa8] sm:$0xf]
      %v1435 = vld [vmem:[%s1391 + $0xac] sm:$0xf]
      %v1436 = vld [vmem:[%s1391 + $0xb0] sm:$0xf]
      %v1437 = vld [vmem:[%s1391 + $0xb4] sm:$0xf]
      %v1438 = vld [vmem:[%s1391 + $0xb8] sm:$0xf]
      %v1439 = vld [vmem:[%s1391 + $0xbc] sm:$0xf]
      %v1456 = vunpack.c.l.b16 %v1375
      %v1457 = vunpack.c.h.b16 %v1375
      %v1458 = vunpack.c.l.b16 %v1376
      %v1459 = vunpack.c.l.b16 %v1377
      %v1460 = vunpack.c.h.b16 %v1377
      %v1461 = vunpack.c.l.b16 %v1378
      %v1462 = vunpack.c.l.b16 %v1379
      %v1463 = vunpack.c.h.b16 %v1379
      %v1464 = vunpack.c.l.b16 %v1380
      %v1465 = vunpack.c.l.b16 %v1381
      %v1466 = vunpack.c.h.b16 %v1381
      %v1467 = vunpack.c.l.b16 %v1382
      %v1468 = vunpack.c.l.b16 %v1383
      %v1469 = vunpack.c.h.b16 %v1383
      %v1470 = vunpack.c.l.b16 %v1384
      %v1471 = vunpack.c.l.b16 %v1385
      %v1472 = vunpack.c.h.b16 %v1385
      %v1473 = vunpack.c.l.b16 %v1386
      %v1474 = vunpack.c.l.b16 %v1387
      %v1475 = vunpack.c.h.b16 %v1387
      %v1476 = vunpack.c.l.b16 %v1388
      %v1477 = vunpack.c.l.b16 %v1389
      %v1478 = vunpack.c.h.b16 %v1389
      %v1479 = vunpack.c.l.b16 %v1390
      %v1480 = vpack.c.b16 %v1459, %v1456
      %v1481 = vpack.c.b16 %v1460, %v1457
      %v1482 = vpack.c.b16 %v1461, %v1458
      %v1483 = vpack.c.b16 %v1465, %v1462
      %v1484 = vpack.c.b16 %v1466, %v1463
      %v1485 = vpack.c.b16 %v1467, %v1464
      %v1486 = vpack.c.b16 %v1471, %v1468
      %v1487 = vpack.c.b16 %v1472, %v1469
      %v1488 = vpack.c.b16 %v1473, %v1470
      %v1489 = vpack.c.b16 %v1477, %v1474
      %v1490 = vpack.c.b16 %v1478, %v1475
      %v1491 = vpack.c.b16 %v1479, %v1476
      %v1552 = vunpack.c.l.b16 %v1392
      %v1553 = vunpack.c.l.b16 %v1393
      %v1554 = vunpack.c.l.b16 %v1394
      %v1555 = vunpack.c.l.b16 %v1395
      %v1556 = vunpack.c.l.b16 %v1396
      %v1557 = vunpack.c.l.b16 %v1397
      %v1558 = vunpack.c.l.b16 %v1398
      %v1559 = vunpack.c.l.b16 %v1399
      %v1560 = vunpack.c.l.b16 %v1400
      %v1561 = vunpack.c.l.b16 %v1401
      %v1562 = vunpack.c.l.b16 %v1402
      %v1563 = vunpack.c.l.b16 %v1403
      %v1564 = vunpack.c.l.b16 %v1404
      %v1565 = vunpack.c.l.b16 %v1405
      %v1566 = vunpack.c.l.b16 %v1406
      %v1567 = vunpack.c.l.b16 %v1407
      %v1568 = vunpack.c.l.b16 %v1408
      %v1569 = vunpack.c.l.b16 %v1409
      %v1570 = vunpack.c.l.b16 %v1410
      %v1571 = vunpack.c.l.b16 %v1411
      %v1572 = vunpack.c.l.b16 %v1412
      %v1573 = vunpack.c.l.b16 %v1413
      %v1574 = vunpack.c.l.b16 %v1414
      %v1575 = vunpack.c.l.b16 %v1415
      %v1576 = vunpack.c.l.b16 %v1416
      %v1577 = vunpack.c.l.b16 %v1417
      %v1578 = vunpack.c.l.b16 %v1418
      %v1579 = vunpack.c.l.b16 %v1419
      %v1580 = vunpack.c.l.b16 %v1420
      %v1581 = vunpack.c.l.b16 %v1421
      %v1582 = vunpack.c.l.b16 %v1422
      %v1583 = vunpack.c.l.b16 %v1423
      %v1584 = vunpack.c.l.b16 %v1424
      %v1585 = vunpack.c.l.b16 %v1425
      %v1586 = vunpack.c.l.b16 %v1426
      %v1587 = vunpack.c.l.b16 %v1427
      %v1588 = vunpack.c.l.b16 %v1428
      %v1589 = vunpack.c.l.b16 %v1429
      %v1590 = vunpack.c.l.b16 %v1430
      %v1591 = vunpack.c.l.b16 %v1431
      %v1592 = vunpack.c.l.b16 %v1432
      %v1593 = vunpack.c.l.b16 %v1433
      %v1594 = vunpack.c.l.b16 %v1434
      %v1595 = vunpack.c.l.b16 %v1435
      %v1596 = vunpack.c.l.b16 %v1436
      %v1597 = vunpack.c.l.b16 %v1437
      %v1598 = vunpack.c.l.b16 %v1438
      %v1599 = vunpack.c.l.b16 %v1439
      %v1600 = vpack.c.b16 %v1553, %v1552
      %v1601 = vpack.c.b16 %v1555, %v1554
      %v1602 = vpack.c.b16 %v1557, %v1556
      %v1603 = vpack.c.b16 %v1559, %v1558
      %v1604 = vpack.c.b16 %v1561, %v1560
      %v1605 = vpack.c.b16 %v1563, %v1562
      %v1606 = vpack.c.b16 %v1565, %v1564
      %v1607 = vpack.c.b16 %v1567, %v1566
      %v1608 = vpack.c.b16 %v1569, %v1568
      %v1609 = vpack.c.b16 %v1571, %v1570
      %v1610 = vpack.c.b16 %v1573, %v1572
      %v1611 = vpack.c.b16 %v1575, %v1574
      %v1612 = vpack.c.b16 %v1577, %v1576
      %v1613 = vpack.c.b16 %v1579, %v1578
      %v1614 = vpack.c.b16 %v1581, %v1580
      %v1615 = vpack.c.b16 %v1583, %v1582
      %v1616 = vpack.c.b16 %v1585, %v1584
      %v1617 = vpack.c.b16 %v1587, %v1586
      %v1618 = vpack.c.b16 %v1589, %v1588
      %v1619 = vpack.c.b16 %v1591, %v1590
      %v1620 = vpack.c.b16 %v1593, %v1592
      %v1621 = vpack.c.b16 %v1595, %v1594
      %v1622 = vpack.c.b16 %v1597, %v1596
      %v1623 = vpack.c.b16 %v1599, %v1598
      %1648 = vmatprep.subr.bf16.mxu0 0
      %1649 = vmatpush1.bf16.msra.mxu0 %v1600
      %1650 = vmatprep.subr.bf16.mxu0 0
      %1651 = vmatpush1.bf16.msra.mxu0 %v1601
      %1652 = vmatprep.subr.bf16.mxu0 0
      %1653 = vmatpush1.bf16.msra.mxu0 %v1602
      %1654 = vmatprep.subr.bf16.mxu0 0
      %1655 = vmatpush1.bf16.msra.mxu0 %v1603
      %1656 = vmatprep.subr.bf16.mxu0 0
      %1657 = vmatpush1.bf16.msra.mxu0 %v1604
      %1658 = vmatprep.subr.bf16.mxu0 0
      %1659 = vmatpush1.bf16.msra.mxu0 %v1605
      %1660 = vmatprep.subr.bf16.mxu0 0
      %1661 = vmatpush1.bf16.msra.mxu0 %v1606
      %1662 = vmatprep.subr.bf16.mxu0 0
      %1663 = vmatpush1.bf16.msra.mxu0 %v1607
      %1664 = vmatprep.subr.bf16.mxu0 0
      %1665 = vmatpush1.bf16.msra.mxu0 %v1608
      %1666 = vmatprep.subr.bf16.mxu0 0
      %1667 = vmatpush1.bf16.msra.mxu0 %v1609
      %1668 = vmatprep.subr.bf16.mxu0 0
      %1669 = vmatpush1.bf16.msra.mxu0 %v1610
      %1670 = vmatprep.subr.bf16.mxu0 0
      %1671 = vmatpush1.bf16.msra.mxu0 %v1611
      %1672 = vmatprep.subr.bf16.mxu0 0
      %1673 = vmatpush1.bf16.msra.mxu0 %v1612
      %1674 = vmatprep.subr.bf16.mxu0 0
      %1675 = vmatpush1.bf16.msra.mxu0 %v1613
      %1676 = vmatprep.subr.bf16.mxu0 0
      %1677 = vmatpush1.bf16.msra.mxu0 %v1614
      %1678 = vmatprep.subr.bf16.mxu0 0
      %1679 = vmatpush1.bf16.msra.mxu0 %v1615
      %1680 = vmatprep.mubr.bf16.mxu0 %v1481
      %1681 = vmatmul.mubr.bf16.gmra.mrb[0].mxu0 %v1480
      %v1682 = vpop.f32.mrb[0].mxu0
      %v1683 = vadd.f32 0.0, %v1682
      %v1684 = vpop.f32.mrb[0].mxu0
      %v1685 = vpop.f32.mrb[0].mxu0
      %v1686 = vadd.f32 0.0, %v1685
      %v1687 = vpop.f32.mrb[0].mxu0
      %1688 = vmatprep.mubr.bf16.mxu0 %v1484
      %1689 = vmatmul.mubr.bf16.gmra.mrb[0].mxu0 %v1483
      %v1690 = vpop.f32.mrb[0].mxu0
      %v1691 = vadd.f32 0.0, %v1690
      %v1692 = vpop.f32.mrb[0].mxu0
      %v1693 = vpop.f32.mrb[0].mxu0
      %v1694 = vadd.f32 0.0, %v1693
      %v1695 = vpop.f32.mrb[0].mxu0
      %1696 = vmatprep.mubr.bf16.mxu0 %v1487
      %1697 = vmatmul.mubr.bf16.gmra.mrb[0].mxu0 %v1486
      %v1698 = vpop.f32.mrb[0].mxu0
      %v1699 = vadd.f32 0.0, %v1698
      %v1700 = vpop.f32.mrb[0].mxu0
      %v1701 = vpop.f32.mrb[0].mxu0
      %v1702 = vadd.f32 0.0, %v1701
      %v1703 = vpop.f32.mrb[0].mxu0
      %1704 = vmatprep.mubr.bf16.mxu0 %v1490
      %1705 = vmatmul.mubr.bf16.gmra.mrb[0].mxu0 %v1489
      %v1706 = vpop.f32.mrb[0].mxu0
      %v1707 = vadd.f32 0.0, %v1706
      %v1708 = vpop.f32.mrb[0].mxu0
      %v1709 = vpop.f32.mrb[0].mxu0
      %v1710 = vadd.f32 0.0, %v1709
      %v1711 = vpop.f32.mrb[0].mxu0
      %1712 = vdwg.mxu0
      %1713 = vmatprep.subr.bf16.mxu0 0
      %1714 = vmatpush1.bf16.msra.mxu0 %v1616
      %1715 = vmatprep.subr.bf16.mxu0 0
      %1716 = vmatpush1.bf16.msra.mxu0 %v1617
      %1717 = vmatprep.subr.bf16.mxu0 0
      %1718 = vmatpush1.bf16.msra.mxu0 %v1618
      %1719 = vmatprep.subr.bf16.mxu0 0
      %1720 = vmatpush1.bf16.msra.mxu0 %v1619
      %1721 = vmatprep.subr.bf16.mxu0 0
      %1722 = vmatpush1.bf16.msra.mxu0 %v1620
      %1723 = vmatprep.subr.bf16.mxu0 0
      %1724 = vmatpush1.bf16.msra.mxu0 %v1621
      %1725 = vmatprep.subr.bf16.mxu0 0
      %1726 = vmatpush1.bf16.msra.mxu0 %v1622
      %1727 = vmatprep.subr.bf16.mxu0 0
      %1728 = vmatpush1.bf16.msra.mxu0 %v1623
      %1729 = vmatprep.subr.bf16.mxu0 0
      %1730 = vmatpush1.bf16.msra.mxu0 0
      %1731 = vmatprep.subr.bf16.mxu0 0
      %1732 = vmatpush1.bf16.msra.mxu0 0
      %1733 = vmatprep.subr.bf16.mxu0 0
      %1734 = vmatpush1.bf16.msra.mxu0 0
      %1735 = vmatprep.subr.bf16.mxu0 0
      %1736 = vmatpush1.bf16.msra.mxu0 0
      %1737 = vmatprep.subr.bf16.mxu0 0
      %1738 = vmatpush1.bf16.msra.mxu0 0
      %1739 = vmatprep.subr.bf16.mxu0 0
      %1740 = vmatpush1.bf16.msra.mxu0 0
      %1741 = vmatprep.subr.bf16.mxu0 0
      %1742 = vmatpush1.bf16.msra.mxu0 0
      %1743 = vmatprep.subr.bf16.mxu0 0
      %1744 = vmatpush1.bf16.msra.mxu0 0
      %1745 = vmatprep.mubr.bf16.mxu0 0
      %1746 = vmatmul.mubr.bf16.gmra.mrb[0].mxu0 %v1482
      %v1747 = vpop.f32.mrb[0].mxu0
      %v1748 = vadd.f32 %v1683, %v1747
      %v1749 = vpop.f32.mrb[0].mxu0
      %v1750 = vpop.f32.mrb[0].mxu0
      %v1751 = vadd.f32 %v1686, %v1750
      %v1752 = vpop.f32.mrb[0].mxu0
      %1753 = vmatprep.mubr.bf16.mxu0 0
      %1754 = vmatmul.mubr.bf16.gmra.mrb[0].mxu0 %v1485
      %v1755 = vpop.f32.mrb[0].mxu0
      %v1756 = vadd.f32 %v1691, %v1755
      %v1757 = vpop.f32.mrb[0].mxu0
      %v1758 = vpop.f32.mrb[0].mxu0
      %v1759 = vadd.f32 %v1694, %v1758
      %v1760 = vpop.f32.mrb[0].mxu0
      %1761 = vmatprep.mubr.bf16.mxu0 0
      %1762 = vmatmul.mubr.bf16.gmra.mrb[0].mxu0 %v1488
      %v1763 = vpop.f32.mrb[0].mxu0
      %v1764 = vadd.f32 %v1699, %v1763
      %v1765 = vpop.f32.mrb[0].mxu0
      %v1766 = vpop.f32.mrb[0].mxu0
      %v1767 = vadd.f32 %v1702, %v1766
      %v1768 = vpop.f32.mrb[0].mxu0
      %1769 = vmatprep.mubr.bf16.mxu0 0
      %1770 = vmatmul.mubr.bf16.gmra.mrb[0].mxu0 %v1491
      %v1771 = vpop.f32.mrb[0].mxu0
      %v1772 = vadd.f32 %v1707, %v1771
      %v1773 = vpop.f32.mrb[0].mxu0
      %v1774 = vpop.f32.mrb[0].mxu0
      %v1775 = vadd.f32 %v1710, %v1774
      %v1776 = vpop.f32.mrb[0].mxu0
      %1777 = vdwg.mxu0
      %v1794 = vunpack.c.l.b16 %v1310
      %v1795 = vunpack.c.h.b16 %v1310
      %v1796 = vunpack.c.l.b16 %v1311
      %v1797 = vunpack.c.l.b16 %v1312
      %v1798 = vunpack.c.h.b16 %v1312
      %v1799 = vunpack.c.l.b16 %v1313
      %v1800 = vunpack.c.l.b16 %v1314
      %v1801 = vunpack.c.h.b16 %v1314
      %v1802 = vunpack.c.l.b16 %v1315
      %v1803 = vunpack.c.l.b16 %v1316
      %v1804 = vunpack.c.h.b16 %v1316
      %v1805 = vunpack.c.l.b16 %v1317
      %v1806 = vunpack.c.l.b16 %v1318
      %v1807 = vunpack.c.h.b16 %v1318
      %v1808 = vunpack.c.l.b16 %v1319
      %v1809 = vunpack.c.l.b16 %v1320
      %v1810 = vunpack.c.h.b16 %v1320
      %v1811 = vunpack.c.l.b16 %v1321
      %v1812 = vunpack.c.l.b16 %v1322
      %v1813 = vunpack.c.h.b16 %v1322
      %v1814 = vunpack.c.l.b16 %v1323
      %v1815 = vunpack.c.l.b16 %v1324
      %v1816 = vunpack.c.h.b16 %v1324
      %v1817 = vunpack.c.l.b16 %v1325
      %v1818 = vpack.c.b16 %v1797, %v1794
      %v1819 = vpack.c.b16 %v1798, %v1795
      %v1820 = vpack.c.b16 %v1799, %v1796
      %v1821 = vpack.c.b16 %v1803, %v1800
      %v1822 = vpack.c.b16 %v1804, %v1801
      %v1823 = vpack.c.b16 %v1805, %v1802
      %v1824 = vpack.c.b16 %v1809, %v1806
      %v1825 = vpack.c.b16 %v1810, %v1807
      %v1826 = vpack.c.b16 %v1811, %v1808
      %v1827 = vpack.c.b16 %v1815, %v1812
      %v1828 = vpack.c.b16 %v1816, %v1813
      %v1829 = vpack.c.b16 %v1817, %v1814
      %v1890 = vunpack.c.l.b16 %v1326
      %v1891 = vunpack.c.l.b16 %v1327
      %v1892 = vunpack.c.l.b16 %v1328
      %v1893 = vunpack.c.l.b16 %v1329
      %v1894 = vunpack.c.l.b16 %v1330
      %v1895 = vunpack.c.l.b16 %v1331
      %v1896 = vunpack.c.l.b16 %v1332
      %v1897 = vunpack.c.l.b16 %v1333
      %v1898 = vunpack.c.l.b16 %v1334
      %v1899 = vunpack.c.l.b16 %v1335
      %v1900 = vunpack.c.l.b16 %v1336
      %v1901 = vunpack.c.l.b16 %v1337
      %v1902 = vunpack.c.l.b16 %v1338
      %v1903 = vunpack.c.l.b16 %v1339
      %v1904 = vunpack.c.l.b16 %v1340
      %v1905 = vunpack.c.l.b16 %v1341
      %v1906 = vunpack.c.l.b16 %v1342
      %v1907 = vunpack.c.l.b16 %v1343
      %v1908 = vunpack.c.l.b16 %v1344
      %v1909 = vunpack.c.l.b16 %v1345
      %v1910 = vunpack.c.l.b16 %v1346
      %v1911 = vunpack.c.l.b16 %v1347
      %v1912 = vunpack.c.l.b16 %v1348
      %v1913 = vunpack.c.l.b16 %v1349
      %v1914 = vunpack.c.l.b16 %v1350
      %v1915 = vunpack.c.l.b16 %v1351
      %v1916 = vunpack.c.l.b16 %v1352
      %v1917 = vunpack.c.l.b16 %v1353
      %v1918 = vunpack.c.l.b16 %v1354
      %v1919 = vunpack.c.l.b16 %v1355
      %v1920 = vunpack.c.l.b16 %v1356
      %v1921 = vunpack.c.l.b16 %v1357
      %v1922 = vunpack.c.l.b16 %v1358
      %v1923 = vunpack.c.l.b16 %v1359
      %v1924 = vunpack.c.l.b16 %v1360
      %v1925 = vunpack.c.l.b16 %v1361
      %v1926 = vunpack.c.l.b16 %v1362
      %v1927 = vunpack.c.l.b16 %v1363
      %v1928 = vunpack.c.l.b16 %v1364
      %v1929 = vunpack.c.l.b16 %v1365
      %v1930 = vunpack.c.l.b16 %v1366
      %v1931 = vunpack.c.l.b16 %v1367
      %v1932 = vunpack.c.l.b16 %v1368
      %v1933 = vunpack.c.l.b16 %v1369
      %v1934 = vunpack.c.l.b16 %v1370
      %v1935 = vunpack.c.l.b16 %v1371
      %v1936 = vunpack.c.l.b16 %v1372
      %v1937 = vunpack.c.l.b16 %v1373
      %v1938 = vpack.c.b16 %v1891, %v1890
      %v1939 = vpack.c.b16 %v1893, %v1892
      %v1940 = vpack.c.b16 %v1895, %v1894
      %v1941 = vpack.c.b16 %v1897, %v1896
      %v1942 = vpack.c.b16 %v1899, %v1898
      %v1943 = vpack.c.b16 %v1901, %v1900
      %v1944 = vpack.c.b16 %v1903, %v1902
      %v1945 = vpack.c.b16 %v1905, %v1904
      %v1946 = vpack.c.b16 %v1907, %v1906
      %v1947 = vpack.c.b16 %v1909, %v1908
      %v1948 = vpack.c.b16 %v1911, %v1910
      %v1949 = vpack.c.b16 %v1913, %v1912
      %v1950 = vpack.c.b16 %v1915, %v1914
      %v1951 = vpack.c.b16 %v1917, %v1916
      %v1952 = vpack.c.b16 %v1919, %v1918
      %v1953 = vpack.c.b16 %v1921, %v1920
      %v1954 = vpack.c.b16 %v1923, %v1922
      %v1955 = vpack.c.b16 %v1925, %v1924
      %v1956 = vpack.c.b16 %v1927, %v1926
      %v1957 = vpack.c.b16 %v1929, %v1928
      %v1958 = vpack.c.b16 %v1931, %v1930
      %v1959 = vpack.c.b16 %v1933, %v1932
      %v1960 = vpack.c.b16 %v1935, %v1934
      %v1961 = vpack.c.b16 %v1937, %v1936
      %1986 = vmatprep.subr.bf16.mxu0 0
      %1987 = vmatpush1.bf16.msra.mxu0 %v1938
      %1988 = vmatprep.subr.bf16.mxu0 0
      %1989 = vmatpush1.bf16.msra.mxu0 %v1939
      %1990 = vmatprep.subr.bf16.mxu0 0
      %1991 = vmatpush1.bf16.msra.mxu0 %v1940
      %1992 = vmatprep.subr.bf16.mxu0 0
      %1993 = vmatpush1.bf16.msra.mxu0 %v1941
      %1994 = vmatprep.subr.bf16.mxu0 0
      %1995 = vmatpush1.bf16.msra.mxu0 %v1942
      %1996 = vmatprep.subr.bf16.mxu0 0
      %1997 = vmatpush1.bf16.msra.mxu0 %v1943
      %1998 = vmatprep.subr.bf16.mxu0 0
      %1999 = vmatpush1.bf16.msra.mxu0 %v1944
      %2000 = vmatprep.subr.bf16.mxu0 0
      %2001 = vmatpush1.bf16.msra.mxu0 %v1945
      %2002 = vmatprep.subr.bf16.mxu0 0
      %2003 = vmatpush1.bf16.msra.mxu0 %v1946
      %2004 = vmatprep.subr.bf16.mxu0 0
      %2005 = vmatpush1.bf16.msra.mxu0 %v1947
      %2006 = vmatprep.subr.bf16.mxu0 0
      %2007 = vmatpush1.bf16.msra.mxu0 %v1948
      %2008 = vmatprep.subr.bf16.mxu0 0
      %2009 = vmatpush1.bf16.msra.mxu0 %v1949
      %2010 = vmatprep.subr.bf16.mxu0 0
      %2011 = vmatpush1.bf16.msra.mxu0 %v1950
      %2012 = vmatprep.subr.bf16.mxu0 0
      %2013 = vmatpush1.bf16.msra.mxu0 %v1951
      %2014 = vmatprep.subr.bf16.mxu0 0
      %2015 = vmatpush1.bf16.msra.mxu0 %v1952
      %2016 = vmatprep.subr.bf16.mxu0 0
      %2017 = vmatpush1.bf16.msra.mxu0 %v1953
      %2018 = vmatprep.mubr.bf16.mxu0 %v1819
      %2019 = vmatmul.mubr.bf16.gmra.mrb[0].mxu0 %v1818
      %v2020 = vpop.f32.mrb[0].mxu0
      %v2021 = vadd.f32 %v1748, %v2020
      %v2022 = vpop.f32.mrb[0].mxu0
      %v2023 = vpop.f32.mrb[0].mxu0
      %v2024 = vadd.f32 %v1751, %v2023
      %v2025 = vpop.f32.mrb[0].mxu0
      %2026 = vmatprep.mubr.bf16.mxu0 %v1822
      %2027 = vmatmul.mubr.bf16.gmra.mrb[0].mxu0 %v1821
      %v2028 = vpop.f32.mrb[0].mxu0
      %v2029 = vadd.f32 %v1756, %v2028
      %v2030 = vpop.f32.mrb[0].mxu0
      %v2031 = vpop.f32.mrb[0].mxu0
      %v2032 = vadd.f32 %v1759, %v2031
      %v2033 = vpop.f32.mrb[0].mxu0
      %2034 = vmatprep.mubr.bf16.mxu0 %v1825
      %2035 = vmatmul.mubr.bf16.gmra.mrb[0].mxu0 %v1824
      %v2036 = vpop.f32.mrb[0].mxu0
      %v2037 = vadd.f32 %v1764, %v2036
      %v2038 = vpop.f32.mrb[0].mxu0
      %v2039 = vpop.f32.mrb[0].mxu0
      %v2040 = vadd.f32 %v1767, %v2039
      %v2041 = vpop.f32.mrb[0].mxu0
      %2042 = vmatprep.mubr.bf16.mxu0 %v1828
      %2043 = vmatmul.mubr.bf16.gmra.mrb[0].mxu0 %v1827
      %v2044 = vpop.f32.mrb[0].mxu0
      %v2045 = vadd.f32 %v1772, %v2044
      %v2046 = vpop.f32.mrb[0].mxu0
      %v2047 = vpop.f32.mrb[0].mxu0
      %v2048 = vadd.f32 %v1775, %v2047
      %v2049 = vpop.f32.mrb[0].mxu0
      %2050 = vdwg.mxu0
      %2051 = vmatprep.subr.bf16.mxu0 0
      %2052 = vmatpush1.bf16.msra.mxu0 %v1954
      %2053 = vmatprep.subr.bf16.mxu0 0
      %2054 = vmatpush1.bf16.msra.mxu0 %v1955
      %2055 = vmatprep.subr.bf16.mxu0 0
      %2056 = vmatpush1.bf16.msra.mxu0 %v1956
      %2057 = vmatprep.subr.bf16.mxu0 0
      %2058 = vmatpush1.bf16.msra.mxu0 %v1957
      %2059 = vmatprep.subr.bf16.mxu0 0
      %2060 = vmatpush1.bf16.msra.mxu0 %v1958
      %2061 = vmatprep.subr.bf16.mxu0 0
      %2062 = vmatpush1.bf16.msra.mxu0 %v1959
      %2063 = vmatprep.subr.bf16.mxu0 0
      %2064 = vmatpush1.bf16.msra.mxu0 %v1960
      %2065 = vmatprep.subr.bf16.mxu0 0
      %2066 = vmatpush1.bf16.msra.mxu0 %v1961
      %2067 = vmatprep.subr.bf16.mxu0 0
      %2068 = vmatpush1.bf16.msra.mxu0 0
      %2069 = vmatprep.subr.bf16.mxu0 0
      %2070 = vmatpush1.bf16.msra.mxu0 0
      %2071 = vmatprep.subr.bf16.mxu0 0
      %2072 = vmatpush1.bf16.msra.mxu0 0
      %2073 = vmatprep.subr.bf16.mxu0 0
      %2074 = vmatpush1.bf16.msra.mxu0 0
      %2075 = vmatprep.subr.bf16.mxu0 0
      %2076 = vmatpush1.bf16.msra.mxu0 0
      %2077 = vmatprep.subr.bf16.mxu0 0
      %2078 = vmatpush1.bf16.msra.mxu0 0
      %2079 = vmatprep.subr.bf16.mxu0 0
      %2080 = vmatpush1.bf16.msra.mxu0 0
      %2081 = vmatprep.subr.bf16.mxu0 0
      %2082 = vmatpush1.bf16.msra.mxu0 0
      %2083 = vmatprep.mubr.bf16.mxu0 0
      %2084 = vmatmul.mubr.bf16.gmra.mrb[0].mxu0 %v1820
      %v2085 = vpop.f32.mrb[0].mxu0
      %v2086 = vadd.f32 %v2021, %v2085
      %v2087 = vpop.f32.mrb[0].mxu0
      %v2088 = vpop.f32.mrb[0].mxu0
      %v2089 = vadd.f32 %v2024, %v2088
      %v2090 = vpop.f32.mrb[0].mxu0
      %2091 = vmatprep.mubr.bf16.mxu0 0
      %2092 = vmatmul.mubr.bf16.gmra.mrb[0].mxu0 %v1823
      %v2093 = vpop.f32.mrb[0].mxu0
      %v2094 = vadd.f32 %v2029, %v2093
      %v2095 = vpop.f32.mrb[0].mxu0
      %v2096 = vpop.f32.mrb[0].mxu0
      %v2097 = vadd.f32 %v2032, %v2096
      %v2098 = vpop.f32.mrb[0].mxu0
      %2099 = vmatprep.mubr.bf16.mxu0 0
      %2100 = vmatmul.mubr.bf16.gmra.mrb[0].mxu0 %v1826
      %v2101 = vpop.f32.mrb[0].mxu0
      %v2102 = vadd.f32 %v2037, %v2101
      %v2103 = vpop.f32.mrb[0].mxu0
      %v2104 = vpop.f32.mrb[0].mxu0
      %v2105 = vadd.f32 %v2040, %v2104
      %v2106 = vpop.f32.mrb[0].mxu0
      %2107 = vmatprep.mubr.bf16.mxu0 0
      %2108 = vmatmul.mubr.bf16.gmra.mrb[0].mxu0 %v1829
      %v2109 = vpop.f32.mrb[0].mxu0
      %v2110 = vadd.f32 %v2045, %v2109
      %v2111 = vpop.f32.mrb[0].mxu0
      %v2112 = vpop.f32.mrb[0].mxu0
      %v2113 = vadd.f32 %v2048, %v2112
      %v2114 = vpop.f32.mrb[0].mxu0
      %2115 = vdwg.mxu0
      %s2116 = scalar_lea.vmem [#allocation2], 24
      %v2117 = vld [vmem:[%s2116] sm:$0xff]
      %v2118 = vld [vmem:[%s2116 + $0x8] sm:$0xf]
      %v2119 = vld [vmem:[%s2116 + $0xc] sm:$0xff]
      %v2120 = vld [vmem:[%s2116 + $0x14] sm:$0xf]
      %v2121 = vld [vmem:[%s2116 + $0x18] sm:$0xff]
      %v2122 = vld [vmem:[%s2116 + $0x20] sm:$0xf]
      %v2123 = vld [vmem:[%s2116 + $0x24] sm:$0xff]
      %v2124 = vld [vmem:[%s2116 + $0x2c] sm:$0xf]
      %v2125 = vld [vmem:[%s2116 + $0x30] sm:$0xff]
      %v2126 = vld [vmem:[%s2116 + $0x38] sm:$0xf]
      %v2127 = vld [vmem:[%s2116 + $0x3c] sm:$0xff]
      %v2128 = vld [vmem:[%s2116 + $0x44] sm:$0xf]
      %v2129 = vld [vmem:[%s2116 + $0x48] sm:$0xff]
      %v2130 = vld [vmem:[%s2116 + $0x50] sm:$0xf]
      %v2131 = vld [vmem:[%s2116 + $0x54] sm:$0xff]
      %v2132 = vld [vmem:[%s2116 + $0x5c] sm:$0xf]
      %s2133 = scalar_lea.vmem %s5, 384
      %v2134 = vld [vmem:[%s2133] sm:$0xf]
      %v2135 = vld [vmem:[%s2133 + $0x4] sm:$0xf]
      %v2136 = vld [vmem:[%s2133 + $0x8] sm:$0xf]
      %v2137 = vld [vmem:[%s2133 + $0xc] sm:$0xf]
      %v2138 = vld [vmem:[%s2133 + $0x10] sm:$0xf]
      %v2139 = vld [vmem:[%s2133 + $0x14] sm:$0xf]
      %v2140 = vld [vmem:[%s2133 + $0x18] sm:$0xf]
      %v2141 = vld [vmem:[%s2133 + $0x1c] sm:$0xf]
      %v2142 = vld [vmem:[%s2133 + $0x20] sm:$0xf]
      %v2143 = vld [vmem:[%s2133 + $0x24] sm:$0xf]
      %v2144 = vld [vmem:[%s2133 + $0x28] sm:$0xf]
      %v2145 = vld [vmem:[%s2133 + $0x2c] sm:$0xf]
      %v2146 = vld [vmem:[%s2133 + $0x30] sm:$0xf]
      %v2147 = vld [vmem:[%s2133 + $0x34] sm:$0xf]
      %v2148 = vld [vmem:[%s2133 + $0x38] sm:$0xf]
      %v2149 = vld [vmem:[%s2133 + $0x3c] sm:$0xf]
      %v2150 = vld [vmem:[%s2133 + $0x40] sm:$0xf]
      %v2151 = vld [vmem:[%s2133 + $0x44] sm:$0xf]
      %v2152 = vld [vmem:[%s2133 + $0x48] sm:$0xf]
      %v2153 = vld [vmem:[%s2133 + $0x4c] sm:$0xf]
      %v2154 = vld [vmem:[%s2133 + $0x50] sm:$0xf]
      %v2155 = vld [vmem:[%s2133 + $0x54] sm:$0xf]
      %v2156 = vld [vmem:[%s2133 + $0x58] sm:$0xf]
      %v2157 = vld [vmem:[%s2133 + $0x5c] sm:$0xf]
      %v2158 = vld [vmem:[%s2133 + $0x60] sm:$0xf]
      %v2159 = vld [vmem:[%s2133 + $0x64] sm:$0xf]
      %v2160 = vld [vmem:[%s2133 + $0x68] sm:$0xf]
      %v2161 = vld [vmem:[%s2133 + $0x6c] sm:$0xf]
      %v2162 = vld [vmem:[%s2133 + $0x70] sm:$0xf]
      %v2163 = vld [vmem:[%s2133 + $0x74] sm:$0xf]
      %v2164 = vld [vmem:[%s2133 + $0x78] sm:$0xf]
      %v2165 = vld [vmem:[%s2133 + $0x7c] sm:$0xf]
      %v2166 = vld [vmem:[%s2133 + $0x80] sm:$0xf]
      %v2167 = vld [vmem:[%s2133 + $0x84] sm:$0xf]
      %v2168 = vld [vmem:[%s2133 + $0x88] sm:$0xf]
      %v2169 = vld [vmem:[%s2133 + $0x8c] sm:$0xf]
      %v2170 = vld [vmem:[%s2133 + $0x90] sm:$0xf]
      %v2171 = vld [vmem:[%s2133 + $0x94] sm:$0xf]
      %v2172 = vld [vmem:[%s2133 + $0x98] sm:$0xf]
      %v2173 = vld [vmem:[%s2133 + $0x9c] sm:$0xf]
      %v2174 = vld [vmem:[%s2133 + $0xa0] sm:$0xf]
      %v2175 = vld [vmem:[%s2133 + $0xa4] sm:$0xf]
      %v2176 = vld [vmem:[%s2133 + $0xa8] sm:$0xf]
      %v2177 = vld [vmem:[%s2133 + $0xac] sm:$0xf]
      %v2178 = vld [vmem:[%s2133 + $0xb0] sm:$0xf]
      %v2179 = vld [vmem:[%s2133 + $0xb4] sm:$0xf]
      %v2180 = vld [vmem:[%s2133 + $0xb8] sm:$0xf]
      %v2181 = vld [vmem:[%s2133 + $0xbc] sm:$0xf]
      %v2198 = vunpack.c.l.b16 %v2117
      %v2199 = vunpack.c.h.b16 %v2117
      %v2200 = vunpack.c.l.b16 %v2118
      %v2201 = vunpack.c.l.b16 %v2119
      %v2202 = vunpack.c.h.b16 %v2119
      %v2203 = vunpack.c.l.b16 %v2120
      %v2204 = vunpack.c.l.b16 %v2121
      %v2205 = vunpack.c.h.b16 %v2121
      %v2206 = vunpack.c.l.b16 %v2122
      %v2207 = vunpack.c.l.b16 %v2123
      %v2208 = vunpack.c.h.b16 %v2123
      %v2209 = vunpack.c.l.b16 %v2124
      %v2210 = vunpack.c.l.b16 %v2125
      %v2211 = vunpack.c.h.b16 %v2125
      %v2212 = vunpack.c.l.b16 %v2126
      %v2213 = vunpack.c.l.b16 %v2127
      %v2214 = vunpack.c.h.b16 %v2127
      %v2215 = vunpack.c.l.b16 %v2128
      %v2216 = vunpack.c.l.b16 %v2129
      %v2217 = vunpack.c.h.b16 %v2129
      %v2218 = vunpack.c.l.b16 %v2130
      %v2219 = vunpack.c.l.b16 %v2131
      %v2220 = vunpack.c.h.b16 %v2131
      %v2221 = vunpack.c.l.b16 %v2132
      %v2222 = vpack.c.b16 %v2201, %v2198
      %v2223 = vpack.c.b16 %v2202, %v2199
      %v2224 = vpack.c.b16 %v2203, %v2200
      %v2225 = vpack.c.b16 %v2207, %v2204
      %v2226 = vpack.c.b16 %v2208, %v2205
      %v2227 = vpack.c.b16 %v2209, %v2206
      %v2228 = vpack.c.b16 %v2213, %v2210
      %v2229 = vpack.c.b16 %v2214, %v2211
      %v2230 = vpack.c.b16 %v2215, %v2212
      %v2231 = vpack.c.b16 %v2219, %v2216
      %v2232 = vpack.c.b16 %v2220, %v2217
      %v2233 = vpack.c.b16 %v2221, %v2218
      %v2294 = vunpack.c.l.b16 %v2134
      %v2295 = vunpack.c.l.b16 %v2135
      %v2296 = vunpack.c.l.b16 %v2136
      %v2297 = vunpack.c.l.b16 %v2137
      %v2298 = vunpack.c.l.b16 %v2138
      %v2299 = vunpack.c.l.b16 %v2139
      %v2300 = vunpack.c.l.b16 %v2140
      %v2301 = vunpack.c.l.b16 %v2141
      %v2302 = vunpack.c.l.b16 %v2142
      %v2303 = vunpack.c.l.b16 %v2143
      %v2304 = vunpack.c.l.b16 %v2144
      %v2305 = vunpack.c.l.b16 %v2145
      %v2306 = vunpack.c.l.b16 %v2146
      %v2307 = vunpack.c.l.b16 %v2147
      %v2308 = vunpack.c.l.b16 %v2148
      %v2309 = vunpack.c.l.b16 %v2149
      %v2310 = vunpack.c.l.b16 %v2150
      %v2311 = vunpack.c.l.b16 %v2151
      %v2312 = vunpack.c.l.b16 %v2152
      %v2313 = vunpack.c.l.b16 %v2153
      %v2314 = vunpack.c.l.b16 %v2154
      %v2315 = vunpack.c.l.b16 %v2155
      %v2316 = vunpack.c.l.b16 %v2156
      %v2317 = vunpack.c.l.b16 %v2157
      %v2318 = vunpack.c.l.b16 %v2158
      %v2319 = vunpack.c.l.b16 %v2159
      %v2320 = vunpack.c.l.b16 %v2160
      %v2321 = vunpack.c.l.b16 %v2161
      %v2322 = vunpack.c.l.b16 %v2162
      %v2323 = vunpack.c.l.b16 %v2163
      %v2324 = vunpack.c.l.b16 %v2164
      %v2325 = vunpack.c.l.b16 %v2165
      %v2326 = vunpack.c.l.b16 %v2166
      %v2327 = vunpack.c.l.b16 %v2167
      %v2328 = vunpack.c.l.b16 %v2168
      %v2329 = vunpack.c.l.b16 %v2169
      %v2330 = vunpack.c.l.b16 %v2170
      %v2331 = vunpack.c.l.b16 %v2171
      %v2332 = vunpack.c.l.b16 %v2172
      %v2333 = vunpack.c.l.b16 %v2173
      %v2334 = vunpack.c.l.b16 %v2174
      %v2335 = vunpack.c.l.b16 %v2175
      %v2336 = vunpack.c.l.b16 %v2176
      %v2337 = vunpack.c.l.b16 %v2177
      %v2338 = vunpack.c.l.b16 %v2178
      %v2339 = vunpack.c.l.b16 %v2179
      %v2340 = vunpack.c.l.b16 %v2180
      %v2341 = vunpack.c.l.b16 %v2181
      %v2342 = vpack.c.b16 %v2295, %v2294
      %v2343 = vpack.c.b16 %v2297, %v2296
      %v2344 = vpack.c.b16 %v2299, %v2298
      %v2345 = vpack.c.b16 %v2301, %v2300
      %v2346 = vpack.c.b16 %v2303, %v2302
      %v2347 = vpack.c.b16 %v2305, %v2304
      %v2348 = vpack.c.b16 %v2307, %v2306
      %v2349 = vpack.c.b16 %v2309, %v2308
      %v2350 = vpack.c.b16 %v2311, %v2310
      %v2351 = vpack.c.b16 %v2313, %v2312
      %v2352 = vpack.c.b16 %v2315, %v2314
      %v2353 = vpack.c.b16 %v2317, %v2316
      %v2354 = vpack.c.b16 %v2319, %v2318
      %v2355 = vpack.c.b16 %v2321, %v2320
      %v2356 = vpack.c.b16 %v2323, %v2322
      %v2357 = vpack.c.b16 %v2325, %v2324
      %v2358 = vpack.c.b16 %v2327, %v2326
      %v2359 = vpack.c.b16 %v2329, %v2328
      %v2360 = vpack.c.b16 %v2331, %v2330
      %v2361 = vpack.c.b16 %v2333, %v2332
      %v2362 = vpack.c.b16 %v2335, %v2334
      %v2363 = vpack.c.b16 %v2337, %v2336
      %v2364 = vpack.c.b16 %v2339, %v2338
      %v2365 = vpack.c.b16 %v2341, %v2340
      %2390 = vmatprep.subr.bf16.mxu0 0
      %2391 = vmatpush1.bf16.msra.mxu0 %v2342
      %2392 = vmatprep.subr.bf16.mxu0 0
      %2393 = vmatpush1.bf16.msra.mxu0 %v2343
      %2394 = vmatprep.subr.bf16.mxu0 0
      %2395 = vmatpush1.bf16.msra.mxu0 %v2344
      %2396 = vmatprep.subr.bf16.mxu0 0
      %2397 = vmatpush1.bf16.msra.mxu0 %v2345
      %2398 = vmatprep.subr.bf16.mxu0 0
      %2399 = vmatpush1.bf16.msra.mxu0 %v2346
      %2400 = vmatprep.subr.bf16.mxu0 0
      %2401 = vmatpush1.bf16.msra.mxu0 %v2347
      %2402 = vmatprep.subr.bf16.mxu0 0
      %2403 = vmatpush1.bf16.msra.mxu0 %v2348
      %2404 = vmatprep.subr.bf16.mxu0 0
      %2405 = vmatpush1.bf16.msra.mxu0 %v2349
      %2406 = vmatprep.subr.bf16.mxu0 0
      %2407 = vmatpush1.bf16.msra.mxu0 %v2350
      %2408 = vmatprep.subr.bf16.mxu0 0
      %2409 = vmatpush1.bf16.msra.mxu0 %v2351
      %2410 = vmatprep.subr.bf16.mxu0 0
      %2411 = vmatpush1.bf16.msra.mxu0 %v2352
      %2412 = vmatprep.subr.bf16.mxu0 0
      %2413 = vmatpush1.bf16.msra.mxu0 %v2353
      %2414 = vmatprep.subr.bf16.mxu0 0
      %2415 = vmatpush1.bf16.msra.mxu0 %v2354
      %2416 = vmatprep.subr.bf16.mxu0 0
      %2417 = vmatpush1.bf16.msra.mxu0 %v2355
      %2418 = vmatprep.subr.bf16.mxu0 0
      %2419 = vmatpush1.bf16.msra.mxu0 %v2356
      %2420 = vmatprep.subr.bf16.mxu0 0
      %2421 = vmatpush1.bf16.msra.mxu0 %v2357
      %2422 = vmatprep.mubr.bf16.mxu0 %v2223
      %2423 = vmatmul.mubr.bf16.gmra.mrb[0].mxu0 %v2222
      %v2424 = vpop.f32.mrb[0].mxu0
      %v2425 = vadd.f32 0.0, %v2424
      %v2426 = vpop.f32.mrb[0].mxu0
      %v2427 = vpop.f32.mrb[0].mxu0
      %v2428 = vadd.f32 0.0, %v2427
      %v2429 = vpop.f32.mrb[0].mxu0
      %2430 = vmatprep.mubr.bf16.mxu0 %v2226
      %2431 = vmatmul.mubr.bf16.gmra.mrb[0].mxu0 %v2225
      %v2432 = vpop.f32.mrb[0].mxu0
      %v2433 = vadd.f32 0.0, %v2432
      %v2434 = vpop.f32.mrb[0].mxu0
      %v2435 = vpop.f32.mrb[0].mxu0
      %v2436 = vadd.f32 0.0, %v2435
      %v2437 = vpop.f32.mrb[0].mxu0
      %2438 = vmatprep.mubr.bf16.mxu0 %v2229
      %2439 = vmatmul.mubr.bf16.gmra.mrb[0].mxu0 %v2228
      %v2440 = vpop.f32.mrb[0].mxu0
      %v2441 = vadd.f32 0.0, %v2440
      %v2442 = vpop.f32.mrb[0].mxu0
      %v2443 = vpop.f32.mrb[0].mxu0
      %v2444 = vadd.f32 0.0, %v2443
      %v2445 = vpop.f32.mrb[0].mxu0
      %2446 = vmatprep.mubr.bf16.mxu0 %v2232
      %2447 = vmatmul.mubr.bf16.gmra.mrb[0].mxu0 %v2231
      %v2448 = vpop.f32.mrb[0].mxu0
      %v2449 = vadd.f32 0.0, %v2448
      %v2450 = vpop.f32.mrb[0].mxu0
      %v2451 = vpop.f32.mrb[0].mxu0
      %v2452 = vadd.f32 0.0, %v2451
      %v2453 = vpop.f32.mrb[0].mxu0
      %2454 = vdwg.mxu0
      %2455 = vmatprep.subr.bf16.mxu0 0
      %2456 = vmatpush1.bf16.msra.mxu0 %v2358
      %2457 = vmatprep.subr.bf16.mxu0 0
      %2458 = vmatpush1.bf16.msra.mxu0 %v2359
      %2459 = vmatprep.subr.bf16.mxu0 0
      %2460 = vmatpush1.bf16.msra.mxu0 %v2360
      %2461 = vmatprep.subr.bf16.mxu0 0
      %2462 = vmatpush1.bf16.msra.mxu0 %v2361
      %2463 = vmatprep.subr.bf16.mxu0 0
      %2464 = vmatpush1.bf16.msra.mxu0 %v2362
      %2465 = vmatprep.subr.bf16.mxu0 0
      %2466 = vmatpush1.bf16.msra.mxu0 %v2363
      %2467 = vmatprep.subr.bf16.mxu0 0
      %2468 = vmatpush1.bf16.msra.mxu0 %v2364
      %2469 = vmatprep.subr.bf16.mxu0 0
      %2470 = vmatpush1.bf16.msra.mxu0 %v2365
      %2471 = vmatprep.subr.bf16.mxu0 0
      %2472 = vmatpush1.bf16.msra.mxu0 0
      %2473 = vmatprep.subr.bf16.mxu0 0
      %2474 = vmatpush1.bf16.msra.mxu0 0
      %2475 = vmatprep.subr.bf16.mxu0 0
      %2476 = vmatpush1.bf16.msra.mxu0 0
      %2477 = vmatprep.subr.bf16.mxu0 0
      %2478 = vmatpush1.bf16.msra.mxu0 0
      %2479 = vmatprep.subr.bf16.mxu0 0
      %2480 = vmatpush1.bf16.msra.mxu0 0
      %2481 = vmatprep.subr.bf16.mxu0 0
      %2482 = vmatpush1.bf16.msra.mxu0 0
      %2483 = vmatprep.subr.bf16.mxu0 0
      %2484 = vmatpush1.bf16.msra.mxu0 0
      %2485 = vmatprep.subr.bf16.mxu0 0
      %2486 = vmatpush1.bf16.msra.mxu0 0
      %2487 = vmatprep.mubr.bf16.mxu0 0
      %2488 = vmatmul.mubr.bf16.gmra.mrb[0].mxu0 %v2224
      %v2489 = vpop.f32.mrb[0].mxu0
      %v2490 = vadd.f32 %v2425, %v2489
      %v2491 = vpop.f32.mrb[0].mxu0
      %v2492 = vpop.f32.mrb[0].mxu0
      %v2493 = vadd.f32 %v2428, %v2492
      %v2494 = vpop.f32.mrb[0].mxu0
      %2495 = vmatprep.mubr.bf16.mxu0 0
      %2496 = vmatmul.mubr.bf16.gmra.mrb[0].mxu0 %v2227
      %v2497 = vpop.f32.mrb[0].mxu0
      %v2498 = vadd.f32 %v2433, %v2497
      %v2499 = vpop.f32.mrb[0].mxu0
      %v2500 = vpop.f32.mrb[0].mxu0
      %v2501 = vadd.f32 %v2436, %v2500
      %v2502 = vpop.f32.mrb[0].mxu0
      %2503 = vmatprep.mubr.bf16.mxu0 0
      %2504 = vmatmul.mubr.bf16.gmra.mrb[0].mxu0 %v2230
      %v2505 = vpop.f32.mrb[0].mxu0
      %v2506 = vadd.f32 %v2441, %v2505
      %v2507 = vpop.f32.mrb[0].mxu0
      %v2508 = vpop.f32.mrb[0].mxu0
      %v2509 = vadd.f32 %v2444, %v2508
      %v2510 = vpop.f32.mrb[0].mxu0
      %2511 = vmatprep.mubr.bf16.mxu0 0
      %2512 = vmatmul.mubr.bf16.gmra.mrb[0].mxu0 %v2233
      %v2513 = vpop.f32.mrb[0].mxu0
      %v2514 = vadd.f32 %v2449, %v2513
      %v2515 = vpop.f32.mrb[0].mxu0
      %v2516 = vpop.f32.mrb[0].mxu0
      %v2517 = vadd.f32 %v2452, %v2516
      %v2518 = vpop.f32.mrb[0].mxu0
      %2519 = vdwg.mxu0
      %v2520 = vadd.f32 %v2086, %v2490
      %v2521 = vadd.f32 %v2089, %v2493
      %v2522 = vadd.f32 %v2094, %v2498
      %v2523 = vadd.f32 %v2097, %v2501
      %v2524 = vadd.f32 %v2102, %v2506
      %v2525 = vadd.f32 %v2105, %v2509
      %v2526 = vadd.f32 %v2110, %v2514
      %v2527 = vadd.f32 %v2113, %v2517
      %v2528 = vld [vmem:[%s6] sm:$0x1]
      %v2529 = vlaneseq
      %v2530 = vshrl.u32 %v2529, 7
      %v2531 = vsub.s32 0, %v2530
      %v2532 = vrot.slane %v2528, %v2531
      %v2533 = vadd.f32 %v2520, %v2532
      %v2534 = vadd.f32 %v2521, %v2532
      %v2535 = vadd.f32 %v2522, %v2532
      %v2536 = vadd.f32 %v2523, %v2532
      %v2537 = vadd.f32 %v2524, %v2532
      %v2538 = vadd.f32 %v2525, %v2532
      %v2539 = vadd.f32 %v2526, %v2532
      %v2540 = vadd.f32 %v2527, %v2532
      %vm2541 = vcmp.ge.f32.partialorder %v2533, 0.0
      %vm2542 = vcmp.ge.f32.partialorder %v2534, 0.0
      %vm2543 = vcmp.ge.f32.partialorder %v2535, 0.0
      %vm2544 = vcmp.ge.f32.partialorder %v2536, 0.0
      %vm2545 = vcmp.ge.f32.partialorder %v2537, 0.0
      %vm2546 = vcmp.ge.f32.partialorder %v2538, 0.0
      %vm2547 = vcmp.ge.f32.partialorder %v2539, 0.0
      %vm2548 = vcmp.ge.f32.partialorder %v2540, 0.0
      %v2549 = vmul.f32 %v736, %v2533
      %v2550 = vmul.f32 %v736, %v2534
      %v2551 = vmul.f32 %v736, %v2535
      %v2552 = vmul.f32 %v736, %v2536
      %v2553 = vmul.f32 %v736, %v2537
      %v2554 = vmul.f32 %v736, %v2538
      %v2555 = vmul.f32 %v736, %v2539
      %v2556 = vmul.f32 %v736, %v2540
      %v2557 = vsel %vm2541, %v2533, %v2549
      %v2558 = vsel %vm2542, %v2534, %v2550
      %v2559 = vsel %vm2543, %v2535, %v2551
      %v2560 = vsel %vm2544, %v2536, %v2552
      %v2561 = vsel %vm2545, %v2537, %v2553
      %v2562 = vsel %vm2546, %v2538, %v2554
      %v2563 = vsel %vm2547, %v2539, %v2555
      %v2564 = vsel %vm2548, %v2540, %v2556
      %v2565 = vld [vmem:[%s6 + $0x1] sm:$0x1]
      %v2566 = vlaneseq
      %v2567 = vshrl.u32 %v2566, 7
      %v2568 = vsub.s32 0, %v2567
      %v2569 = vrot.slane %v2565, %v2568
      %v2570 = vmul.f32 %v2557, %v2569
      %v2571 = vmul.f32 %v2558, %v2569
      %v2572 = vmul.f32 %v2559, %v2569
      %v2573 = vmul.f32 %v2560, %v2569
      %v2574 = vmul.f32 %v2561, %v2569
      %v2575 = vmul.f32 %v2562, %v2569
      %v2576 = vmul.f32 %v2563, %v2569
      %v2577 = vmul.f32 %v2564, %v2569
      %v2578 = vld [vmem:[%s6 + $0x2] sm:$0x1]
      %v2579 = vlaneseq
      %v2580 = vshrl.u32 %v2579, 7
      %v2581 = vsub.s32 0, %v2580
      %v2582 = vrot.slane %v2578, %v2581
      %v2583 = vadd.f32 %v2570, %v2582
      %v2584 = vadd.f32 %v2571, %v2582
      %v2585 = vadd.f32 %v2572, %v2582
      %v2586 = vadd.f32 %v2573, %v2582
      %v2587 = vadd.f32 %v2574, %v2582
      %v2588 = vadd.f32 %v2575, %v2582
      %v2589 = vadd.f32 %v2576, %v2582
      %v2590 = vadd.f32 %v2577, %v2582
      %v2591 = vpack.c.bf16 %v2584, %v2583
      %v2592 = vpack.c.bf16 %v2586, %v2585
      %v2593 = vpack.c.bf16 %v2588, %v2587
      %v2594 = vpack.c.bf16 %v2590, %v2589
      %v2595 = vld [vmem:[%s7] sm:$0xf]
      %v2596 = vld [vmem:[%s7 + $0x4] sm:$0xf]
      %v2597 = vld [vmem:[%s7 + $0x8] sm:$0xf]
      %v2598 = vld [vmem:[%s7 + $0xc] sm:$0xf]
      %v2599 = vld [vmem:[%s7 + $0x10] sm:$0xf]
      %v2600 = vld [vmem:[%s7 + $0x14] sm:$0xf]
      %v2601 = vld [vmem:[%s7 + $0x18] sm:$0xf]
      %v2602 = vld [vmem:[%s7 + $0x1c] sm:$0xf]
      %v2603 = vld [vmem:[%s7 + $0x20] sm:$0xf]
      %v2604 = vld [vmem:[%s7 + $0x24] sm:$0xf]
      %v2605 = vld [vmem:[%s7 + $0x28] sm:$0xf]
      %v2606 = vld [vmem:[%s7 + $0x2c] sm:$0xf]
      %v2607 = vld [vmem:[%s7 + $0x30] sm:$0xf]
      %v2608 = vld [vmem:[%s7 + $0x34] sm:$0xf]
      %v2609 = vld [vmem:[%s7 + $0x38] sm:$0xf]
      %v2610 = vld [vmem:[%s7 + $0x3c] sm:$0xf]
      %v2611 = vld [vmem:[%s8] sm:$0x1]
      %v2612 = vlaneseq
      %v2613 = vshrl.u32 %v2612, 7
      %v2614 = vsub.s32 0, %v2613
      %v2615 = vrot.slane %v2611, %v2614
      %v2632 = vunpack.c.l.b16 %v2595
      %v2633 = vunpack.c.l.b16 %v2596
      %v2634 = vunpack.c.l.b16 %v2597
      %v2635 = vunpack.c.l.b16 %v2598
      %v2636 = vunpack.c.l.b16 %v2599
      %v2637 = vunpack.c.l.b16 %v2600
      %v2638 = vunpack.c.l.b16 %v2601
      %v2639 = vunpack.c.l.b16 %v2602
      %v2640 = vunpack.c.l.b16 %v2603
      %v2641 = vunpack.c.l.b16 %v2604
      %v2642 = vunpack.c.l.b16 %v2605
      %v2643 = vunpack.c.l.b16 %v2606
      %v2644 = vunpack.c.l.b16 %v2607
      %v2645 = vunpack.c.l.b16 %v2608
      %v2646 = vunpack.c.l.b16 %v2609
      %v2647 = vunpack.c.l.b16 %v2610
      %v2648 = vpack.c.b16 %v2633, %v2632
      %v2649 = vpack.c.b16 %v2635, %v2634
      %v2650 = vpack.c.b16 %v2637, %v2636
      %v2651 = vpack.c.b16 %v2639, %v2638
      %v2652 = vpack.c.b16 %v2641, %v2640
      %v2653 = vpack.c.b16 %v2643, %v2642
      %v2654 = vpack.c.b16 %v2645, %v2644
      %v2655 = vpack.c.b16 %v2647, %v2646
      %2664 = vmatprep.subr.bf16.mxu0 0
      %2665 = vmatpush1.bf16.msra.mxu0 %v2648
      %2666 = vmatprep.subr.bf16.mxu0 0
      %2667 = vmatpush1.bf16.msra.mxu0 %v2649
      %2668 = vmatprep.subr.bf16.mxu0 0
      %2669 = vmatpush1.bf16.msra.mxu0 %v2650
      %2670 = vmatprep.subr.bf16.mxu0 0
      %2671 = vmatpush1.bf16.msra.mxu0 %v2651
      %2672 = vmatprep.subr.bf16.mxu0 0
      %2673 = vmatpush1.bf16.msra.mxu0 %v2652
      %2674 = vmatprep.subr.bf16.mxu0 0
      %2675 = vmatpush1.bf16.msra.mxu0 %v2653
      %2676 = vmatprep.subr.bf16.mxu0 0
      %2677 = vmatpush1.bf16.msra.mxu0 %v2654
      %2678 = vmatprep.subr.bf16.mxu0 0
      %2679 = vmatpush1.bf16.msra.mxu0 %v2655
      %2680 = vmatprep.subr.bf16.mxu0 0
      %2681 = vmatpush1.bf16.msra.mxu0 0
      %2682 = vmatprep.subr.bf16.mxu0 0
      %2683 = vmatpush1.bf16.msra.mxu0 0
      %2684 = vmatprep.subr.bf16.mxu0 0
      %2685 = vmatpush1.bf16.msra.mxu0 0
      %2686 = vmatprep.subr.bf16.mxu0 0
      %2687 = vmatpush1.bf16.msra.mxu0 0
      %2688 = vmatprep.subr.bf16.mxu0 0
      %2689 = vmatpush1.bf16.msra.mxu0 0
      %2690 = vmatprep.subr.bf16.mxu0 0
      %2691 = vmatpush1.bf16.msra.mxu0 0
      %2692 = vmatprep.subr.bf16.mxu0 0
      %2693 = vmatpush1.bf16.msra.mxu0 0
      %2694 = vmatprep.subr.bf16.mxu0 0
      %2695 = vmatpush1.bf16.msra.mxu0 0
      %2696 = vmatprep.mubr.bf16.mxu0 0
      %2697 = vmatmul.mubr.bf16.gmra.mrb[0].mxu0 %v2591
      %v2698 = vpop.f32.mrb[0].mxu0
      %v2699 = vadd.f32 %v2615, %v2698
      %v2700 = vpop.f32.mrb[0].mxu0
      %v2701 = vpop.f32.mrb[0].mxu0
      %v2702 = vadd.f32 %v2615, %v2701
      %v2703 = vpop.f32.mrb[0].mxu0
      %2704 = vmatprep.mubr.bf16.mxu0 0
      %2705 = vmatmul.mubr.bf16.gmra.mrb[0].mxu0 %v2592
      %v2706 = vpop.f32.mrb[0].mxu0
      %v2707 = vadd.f32 %v2615, %v2706
      %v2708 = vpop.f32.mrb[0].mxu0
      %v2709 = vpop.f32.mrb[0].mxu0
      %v2710 = vadd.f32 %v2615, %v2709
      %v2711 = vpop.f32.mrb[0].mxu0
      %2712 = vmatprep.mubr.bf16.mxu0 0
      %2713 = vmatmul.mubr.bf16.gmra.mrb[0].mxu0 %v2593
      %v2714 = vpop.f32.mrb[0].mxu0
      %v2715 = vadd.f32 %v2615, %v2714
      %v2716 = vpop.f32.mrb[0].mxu0
      %v2717 = vpop.f32.mrb[0].mxu0
      %v2718 = vadd.f32 %v2615, %v2717
      %v2719 = vpop.f32.mrb[0].mxu0
      %2720 = vmatprep.mubr.bf16.mxu0 0
      %2721 = vmatmul.mubr.bf16.gmra.mrb[0].mxu0 %v2594
      %v2722 = vpop.f32.mrb[0].mxu0
      %v2723 = vadd.f32 %v2615, %v2722
      %v2724 = vpop.f32.mrb[0].mxu0
      %v2725 = vpop.f32.mrb[0].mxu0
      %v2726 = vadd.f32 %v2615, %v2725
      %v2727 = vpop.f32.mrb[0].mxu0
      %2728 = vdwg.mxu0
      %vm2729 = vcmp.ge.f32.partialorder %v2699, 0.0
      %vm2730 = vcmp.ge.f32.partialorder %v2702, 0.0
      %vm2731 = vcmp.ge.f32.partialorder %v2707, 0.0
      %vm2732 = vcmp.ge.f32.partialorder %v2710, 0.0
      %vm2733 = vcmp.ge.f32.partialorder %v2715, 0.0
      %vm2734 = vcmp.ge.f32.partialorder %v2718, 0.0
      %vm2735 = vcmp.ge.f32.partialorder %v2723, 0.0
      %vm2736 = vcmp.ge.f32.partialorder %v2726, 0.0
      %v2737 = vmul.f32 %v736, %v2699
      %v2738 = vmul.f32 %v736, %v2702
      %v2739 = vmul.f32 %v736, %v2707
      %v2740 = vmul.f32 %v736, %v2710
      %v2741 = vmul.f32 %v736, %v2715
      %v2742 = vmul.f32 %v736, %v2718
      %v2743 = vmul.f32 %v736, %v2723
      %v2744 = vmul.f32 %v736, %v2726
      %v2745 = vsel %vm2729, %v2699, %v2737
      %v2746 = vsel %vm2730, %v2702, %v2738
      %v2747 = vsel %vm2731, %v2707, %v2739
      %v2748 = vsel %vm2732, %v2710, %v2740
      %v2749 = vsel %vm2733, %v2715, %v2741
      %v2750 = vsel %vm2734, %v2718, %v2742
      %v2751 = vsel %vm2735, %v2723, %v2743
      %v2752 = vsel %vm2736, %v2726, %v2744
      %v2753 = vld [vmem:[%s8 + $0x1] sm:$0x1]
      %v2754 = vlaneseq
      %v2755 = vshrl.u32 %v2754, 7
      %v2756 = vsub.s32 0, %v2755
      %v2757 = vrot.slane %v2753, %v2756
      %v2758 = vmul.f32 %v2745, %v2757
      %v2759 = vmul.f32 %v2746, %v2757
      %v2760 = vmul.f32 %v2747, %v2757
      %v2761 = vmul.f32 %v2748, %v2757
      %v2762 = vmul.f32 %v2749, %v2757
      %v2763 = vmul.f32 %v2750, %v2757
      %v2764 = vmul.f32 %v2751, %v2757
      %v2765 = vmul.f32 %v2752, %v2757
      %v2766 = vld [vmem:[%s8 + $0x2] sm:$0x1]
      %v2767 = vlaneseq
      %v2768 = vshrl.u32 %v2767, 7
      %v2769 = vsub.s32 0, %v2768
      %v2770 = vrot.slane %v2766, %v2769
      %v2771 = vadd.f32 %v2758, %v2770
      %v2772 = vadd.f32 %v2759, %v2770
      %v2773 = vadd.f32 %v2760, %v2770
      %v2774 = vadd.f32 %v2761, %v2770
      %v2775 = vadd.f32 %v2762, %v2770
      %v2776 = vadd.f32 %v2763, %v2770
      %v2777 = vadd.f32 %v2764, %v2770
      %v2778 = vadd.f32 %v2765, %v2770
      %v2779 = vld [vmem:[%s498 + $0x1] sm:$0xff]
      %v2780 = vld [vmem:[%s498 + $0x11] sm:$0xff]
      %v2781 = vld [vmem:[%s498 + $0x21] sm:$0xff]
      %v2782 = vld [vmem:[%s498 + $0x31] sm:$0xff]
      %v2783 = vld [vmem:[%s498 + $0x41] sm:$0xff]
      %v2784 = vld [vmem:[%s498 + $0x51] sm:$0xff]
      %v2785 = vld [vmem:[%s498 + $0x61] sm:$0xff]
      %v2786 = vld [vmem:[%s498 + $0x71] sm:$0xff]
      %2795 = vrot.lane.b32.xlu0 %v2779, 124
      %v2796 = vpop.permute.xlu0 %2795
      %2797 = vrot.lane.b32.xlu0 %v2780, 124
      %v2798 = vpop.permute.xlu0 %2797
      %2799 = vrot.lane.b32.xlu0 %v2781, 124
      %v2800 = vpop.permute.xlu0 %2799
      %2801 = vrot.lane.b32.xlu0 %v2782, 124
      %v2802 = vpop.permute.xlu0 %2801
      %2803 = vrot.lane.b32.xlu0 %v2783, 124
      %v2804 = vpop.permute.xlu0 %2803
      %2805 = vrot.lane.b32.xlu0 %v2784, 124
      %v2806 = vpop.permute.xlu0 %2805
      %2807 = vrot.lane.b32.xlu0 %v2785, 124
      %v2808 = vpop.permute.xlu0 %2807
      %2809 = vrot.lane.b32.xlu0 %v2786, 124
      %v2810 = vpop.permute.xlu0 %2809
      %v2819 = vmax.f32 %v2779, %v2796
      %v2820 = vmax.f32 %v2780, %v2798
      %v2821 = vmax.f32 %v2781, %v2800
      %v2822 = vmax.f32 %v2782, %v2802
      %v2823 = vmax.f32 %v2783, %v2804
      %v2824 = vmax.f32 %v2784, %v2806
      %v2825 = vmax.f32 %v2785, %v2808
      %v2826 = vmax.f32 %v2786, %v2810
      %2835 = vrot.lane.b32.xlu0 %v2819, 120
      %v2836 = vpop.permute.xlu0 %2835
      %2837 = vrot.lane.b32.xlu0 %v2820, 120
      %v2838 = vpop.permute.xlu0 %2837
      %2839 = vrot.lane.b32.xlu0 %v2821, 120
      %v2840 = vpop.permute.xlu0 %2839
      %2841 = vrot.lane.b32.xlu0 %v2822, 120
      %v2842 = vpop.permute.xlu0 %2841
      %2843 = vrot.lane.b32.xlu0 %v2823, 120
      %v2844 = vpop.permute.xlu0 %2843
      %2845 = vrot.lane.b32.xlu0 %v2824, 120
      %v2846 = vpop.permute.xlu0 %2845
      %2847 = vrot.lane.b32.xlu0 %v2825, 120
      %v2848 = vpop.permute.xlu0 %2847
      %2849 = vrot.lane.b32.xlu0 %v2826, 120
      %v2850 = vpop.permute.xlu0 %2849
      %v2859 = vmax.f32 %v2819, %v2836
      %v2860 = vmax.f32 %v2820, %v2838
      %v2861 = vmax.f32 %v2821, %v2840
      %v2862 = vmax.f32 %v2822, %v2842
      %v2863 = vmax.f32 %v2823, %v2844
      %v2864 = vmax.f32 %v2824, %v2846
      %v2865 = vmax.f32 %v2825, %v2848
      %v2866 = vmax.f32 %v2826, %v2850
      %vm2867 = vcmask 31744
      %v2868 = vsel %vm2867, %v2859, 0.0
      %v2869 = vsel %vm2867, %v2860, 0.0
      %v2870 = vsel %vm2867, %v2861, 0.0
      %v2871 = vsel %vm2867, %v2862, 0.0
      %v2872 = vsel %vm2867, %v2863, 0.0
      %v2873 = vsel %vm2867, %v2864, 0.0
      %v2874 = vsel %vm2867, %v2865, 0.0
      %v2875 = vsel %vm2867, %v2866, 0.0
      %v2876 = vadd.f32 %v2771, %v2868
      %v2877 = vadd.f32 %v2772, %v2869
      %v2878 = vadd.f32 %v2773, %v2870
      %v2879 = vadd.f32 %v2774, %v2871
      %v2880 = vadd.f32 %v2775, %v2872
      %v2881 = vadd.f32 %v2776, %v2873
      %v2882 = vadd.f32 %v2777, %v2874
      %v2883 = vadd.f32 %v2778, %v2875
      %vm2884 = vcmask 64512
      %2885 = vst.msk [vmem:[%s525] sm:$0xff] %vm2884, %v2876
      %2886 = vst.msk [vmem:[%s525 + $0x8] sm:$0xff] %vm2884, %v2877
      %2887 = vst.msk [vmem:[%s525 + $0x10] sm:$0xff] %vm2884, %v2878
      %2888 = vst.msk [vmem:[%s525 + $0x18] sm:$0xff] %vm2884, %v2879
      %2889 = vst.msk [vmem:[%s525 + $0x20] sm:$0xff] %vm2884, %v2880
      %2890 = vst.msk [vmem:[%s525 + $0x28] sm:$0xff] %vm2884, %v2881
      %2891 = vst.msk [vmem:[%s525 + $0x30] sm:$0xff] %vm2884, %v2882
      %2892 = vst.msk [vmem:[%s525 + $0x38] sm:$0xff] %vm2884, %v2883
      %s2893 = smul.u32 8, %s27
      %p2894 = scmp.lt.s32.totalorder %s26, 1
      %s2895 = scalar_select %p2894, %s26, 1
      %p2896 = scmp.lt.s32.totalorder %s2893, 7
      %s2897 = scalar_select %p2896, %s2893, 7
      %s2898 = smul.addr %s2895, 8
      %s2899 = sadd.s32 %s2897, %s2898
      %s2900 = smul.addr %s2899, 8
      %s2901 = scalar_lea.vmem %s10, %s2900
      // Predicated region
      $region61: #{downsample_block_forward.1} parent=59 // pred_check
        %p2902 = pneg %p301
      $region62: #{downsample_block_forward.1} parent=59 // pred_check_branch
        %2904 = sbr.rel (%p2902) target = $region64
      $region63: #{downsample_block_forward.1} parent=59 // pred_region
        %s2905 = smul.u32 8, %s27
      $region64: #{downsample_block_forward.1} parent=59 // pred_fallthru
        _
    $region60: #{downsample_block_forward.1} parent=5 // pred_fallthru
      _
    %p2906 = scmp.le.s32.totalorder 2, %s17
    // Predicated region
    $region65: #{downsample_block_forward.1} parent=5 // pred_check
      %p2907 = pneg %p2906
    $region66: #{downsample_block_forward.1} parent=5 // pred_check_branch
      %2909 = sbr.rel (%p2907) target = $region68
    $region67: #{downsample_block_forward.1} parent=5 // pred_region
      %s2910 = ssub.s32 %s17, 2
      // Predicated region
      $region69: #{downsample_block_forward.1} parent=67 // pred_check
        %p2911 = pneg %p307
      $region70: #{downsample_block_forward.1} parent=67 // pred_check_branch
        %2913 = sbr.rel (%p2911) target = $region72
      $region71: #{downsample_block_forward.1} parent=67 // pred_region
        %s2914 = smul.u32 8, %s29
        %p2915 = scmp.lt.s32.totalorder %s28, 1
        %s2916 = scalar_select %p2915, %s28, 1
        %p2917 = scmp.lt.s32.totalorder %s2914, 7
        %s2918 = scalar_select %p2917, %s2914, 7
        %s2919 = smul.addr %s2916, 8
        %s2920 = sadd.s32 %s2918, %s2919
        %s2921 = smul.addr %s2920, 8
        %s2922 = scalar_lea.vmem %s10, %s2921
      $region72: #{downsample_block_forward.1} parent=67 // pred_fallthru
        _
    $region68: #{downsample_block_forward.1} parent=5 // pred_fallthru
      _
  $region6: #{downsample_block_forward.1} parent=0 // loop_footer
    %s21 = sadd.s32 1, %s17
  $region7: #{downsample_block_forward.1} parent=0 // loop_footer_branch
    %16 = sbr.rel target = $region3
  $region8: #{downsample_block_forward.1} parent=0 // loop_exit
    _

</llo_original>
